<compile_context>
chip_gen: v5e
topology: v5e:2x2
jax: 0.10.0
libtpu: 0.0.40
codegen_flags: <defaults>
</compile_context>

<pallas_src>
import jax
import jax.numpy as jnp
from jax import lax
from jax.experimental import pallas as pl
from jax.experimental.pallas import tpu as pltpu


# -----------------------------------------------------------------------------
# Fused Pallas kernel: encoder + stacked LSTM + vocab projection
# -----------------------------------------------------------------------------
def _make_fused_kernel(num_layers, T1, N, H):
    """Builds the fused forward kernel for static (num_layers, T1, N, H)."""

    def kernel(*refs):
        (patch_ref, pool_ref, cw_ref, cb_ref, fw_ref, fb_ref, emb_ref) = refs[:7]
        layer_refs = refs[7:7 + 3 * num_layers]
        vw_ref, vb_ref, out_ref = refs[7 + 3 * num_layers:]

        # ---- encoder: conv-as-matmul + ReLU + global-avg-pool + FC + ReLU ----
        conv = jnp.dot(patch_ref[...], cw_ref[...],
                       preferred_element_type=jnp.float32) + cb_ref[...]
        conv = jnp.maximum(conv, 0.0)                         # (N*P, C_out)
        # per-image mean pool done on the MXU via an averaging matrix
        pooled = jnp.dot(pool_ref[...], conv,
                         preferred_element_type=jnp.float32)  # (N, C_out)
        feat = jnp.dot(pooled, fw_ref[...],
                       preferred_element_type=jnp.float32) + fb_ref[...]
        feat = jnp.maximum(feat, 0.0)                         # (N, E)

        # ---- decoder: stacked LSTM, time loop statically unrolled ------------
        # x rows are time-major: [feat (t=0), emb[0] (t=1), ..., emb[T-1]]
        x = jnp.concatenate([feat, emb_ref[...]], axis=0)     # (T1*N, E)
        for l in range(num_layers):
            wih_ref, whh_ref, b_ref = layer_refs[3 * l:3 * l + 3]
            # hoisted input projection: one matmul for the whole sequence
            gin = jnp.dot(x, wih_ref[...],
                          preferred_element_type=jnp.float32) + b_ref[...]  # (T1*N, 4H)
            whh = whh_ref[...]                                # (H, 4H), gate order i,f,g,o

            h = jnp.zeros((N, H), jnp.float32)
            c = jnp.zeros((N, H), jnp.float32)
            hs = []
            for t in range(T1):                               # static unroll (T1 small)
                r = t * N
                # one combined recurrent matmul for all 4 gates
                a = gin[r:r + N, :] + jnp.dot(h, whh,
                                              preferred_element_type=jnp.float32)
                i_t = jax.nn.sigmoid(a[:, 0 * H:1 * H])
                f_t = jax.nn.sigmoid(a[:, 1 * H:2 * H])
                g_t = jnp.tanh(a[:, 2 * H:3 * H])
                o_t = jax.nn.sigmoid(a[:, 3 * H:4 * H])
                c = f_t * c + i_t * g_t
                h = o_t * jnp.tanh(c)
                hs.append(h)
            x = jnp.concatenate(hs, axis=0)                   # (T1*N, H)

        # ---- vocab projection: one matmul, one lane-dense (padded) store -----
        out_ref[...] = jnp.dot(x, vw_ref[...],
                               preferred_element_type=jnp.float32) + vb_ref[...]

    return kernel


# -----------------------------------------------------------------------------
# Wrappers (glue in plain JAX: im2col, embedding gather, weight repacking)
# -----------------------------------------------------------------------------
def im2col(images, kh, kw):
    N, C, H, W = images.shape
    oh, ow = H - kh + 1, W - kw + 1
    cols = []
    for i in range(kh):
        for j in range(kw):
            cols.append(images[:, :, i:i + oh, j:j + ow])      # (N, C, oh, ow)
    patches = jnp.stack(cols, axis=2)                          # (N, C, KH*KW, oh, ow)
    patches = patches.reshape(N, C * kh * kw, oh * ow)
    return patches.transpose(0, 2, 1)                          # (N, P, C*KH*KW)


def cnn_to_rnn_forward(images, captions, params):
    """CNNtoRNN.forward: features = encoder(images); outputs = decoder(features, captions)."""
    enc = params["encoder"]
    dec = params["decoder"]

    # ----- encoder operand prep -----
    wc, bc, wf, bf = enc["conv_w"], enc["conv_b"], enc["fc_w"], enc["fc_b"]
    C_out, _, KH, KW = wc.shape
    patches = im2col(images, KH, KW)                           # (N, P, CK)
    N, P, CK = patches.shape
    patches2 = patches.reshape(N * P, CK)                      # (N*P, CK)
    pool_mat = jnp.kron(jnp.eye(N, dtype=jnp.float32),
                        jnp.full((1, P), 1.0 / P, jnp.float32))  # (N, N*P)
    cw_mat = wc.reshape(C_out, CK).T                           # (CK, C_out)
    cb_row = bc.reshape(1, C_out)
    fw_mat = wf.T                                              # (C_out, E)
    fb_row = bf.reshape(1, -1)

    # ----- decoder operand prep -----
    emb = dec["embed"][captions]                               # (T, N, E); dropout == identity
    T = emb.shape[0]
    T1 = T + 1
    E = emb.shape[2]
    emb_flat = emb.reshape(T * N, E)                           # time-major rows

    H = dec["lstm"][0]["w_hh"].shape[1]
    layer_args = []
    for layer in dec["lstm"]:
        w_ih, w_hh = layer["w_ih"], layer["w_hh"]              # (4H, Din), (4H, H)
        b_row = (layer["b_ih"] + layer["b_hh"]).reshape(1, 4 * H)
        wih_T = w_ih.T                                         # (Din, 4H), gate order i,f,g,o
        whh_T = w_hh.T                                         # (H, 4H), combined-gate recurrent
        layer_args += [wih_T, whh_T, b_row]

    lin_w, lin_b = dec["lin_w"], dec["lin_b"]
    V = lin_w.shape[0]
    Vp = ((V + 127) // 128) * 128                              # lane-dense padded vocab
    vw_pad = jnp.zeros((H, Vp), jnp.float32).at[:, :V].set(lin_w.T)
    vb_pad = jnp.zeros((1, Vp), jnp.float32).at[:, :V].set(lin_b.reshape(1, V))
    # TODO(synk): at realistic vocab sizes (V ~ 32k) the vocab projection needs a
    # V-axis grid (tiled out_spec + vmem_limit_bytes) to fit VMEM, esp. on v7x.

    args = ([patches2, pool_mat, cw_mat, cb_row, fw_mat, fb_row, emb_flat]
            + layer_args + [vw_pad, vb_pad])

    def _spec(shape):
        zeros = (0,) * len(shape)
        return pl.BlockSpec(shape, lambda i: zeros)

    kernel = _make_fused_kernel(len(dec["lstm"]), T1, N, H)
    out = pl.pallas_call(
        kernel,
        out_shape=jax.ShapeDtypeStruct((T1 * N, Vp), jnp.float32),
        grid=(1,),
        in_specs=[_spec(a.shape) for a in args],
        out_specs=_spec((T1 * N, Vp)),
        compiler_params=pltpu.CompilerParams(dimension_semantics=("arbitrary",)),
    )(*args)

    return out[:, :V].reshape(T1, N, V)


# -----------------------------------------------------------------------------
# Deterministic parameter init and pure-JAX reference
# -----------------------------------------------------------------------------
def init_params(key, embed_size, hidden_size, vocab_size, num_layers,
                in_channels, conv_channels, ksize=3):
    keys = jax.random.split(key, 16)

    def normal(k, shape, scale=0.1):
        return scale * jax.random.normal(k, shape, dtype=jnp.float32)

    enc = {
        "conv_w": normal(keys[0], (conv_channels, in_channels, ksize, ksize)),
        "conv_b": normal(keys[1], (conv_channels,)),
        "fc_w": normal(keys[2], (embed_size, conv_channels)),
        "fc_b": normal(keys[3], (embed_size,)),
    }
    lstm = []
    for l in range(num_layers):
        din = embed_size if l == 0 else hidden_size
        ks = jax.random.split(keys[4 + l], 4)
        lstm.append({
            "w_ih": normal(ks[0], (4 * hidden_size, din)),
            "w_hh": normal(ks[1], (4 * hidden_size, hidden_size)),
            "b_ih": normal(ks[2], (4 * hidden_size,)),
            "b_hh": normal(ks[3], (4 * hidden_size,)),
        })
    dec = {
        "embed": normal(keys[12], (vocab_size, embed_size), scale=1.0),
        "lstm": lstm,
        "lin_w": normal(keys[13], (vocab_size, hidden_size)),
        "lin_b": normal(keys[14], (vocab_size,)),
    }
    return {"encoder": enc, "decoder": dec}


def reference_forward(images, captions, params):
    enc = params["encoder"]
    C_out, _, KH, KW = enc["conv_w"].shape
    patches = im2col(images, KH, KW)
    wc = enc["conv_w"].reshape(C_out, -1).T
    conv = jnp.maximum(patches @ wc + enc["conv_b"][None, None, :], 0.0)
    pooled = conv.mean(axis=1)
    feat = jnp.maximum(pooled @ enc["fc_w"].T + enc["fc_b"], 0.0)

    dec = params["decoder"]
    emb = dec["embed"][captions]
    x = jnp.concatenate([feat[None], emb], axis=0)
    H = dec["lstm"][0]["w_hh"].shape[1]
    N = x.shape[1]
    for layer in dec["lstm"]:
        wih_T, whh_T = layer["w_ih"].T, layer["w_hh"].T
        b = layer["b_ih"] + layer["b_hh"]

        def step(carry, xt):
            h, c = carry
            g = xt @ wih_T + h @ whh_T + b
            i = jax.nn.sigmoid(g[:, :H])
            f = jax.nn.sigmoid(g[:, H:2 * H])
            gg = jnp.tanh(g[:, 2 * H:3 * H])
            o = jax.nn.sigmoid(g[:, 3 * H:])
            c = f * c + i * gg
            h = o * jnp.tanh(c)
            return (h, c), h

        (_, _), hs = lax.scan(step, (jnp.zeros((N, H), jnp.float32),
                                     jnp.zeros((N, H), jnp.float32)), x)
        x = hs
    return x @ dec["lin_w"].T + dec["lin_b"]


# -----------------------------------------------------------------------------
if __name__ == "__main__":
    embed_size, hidden_size, vocab_size, num_layers = 32, 32, 64, 2
    batch, in_ch, spatial, seq_len = 2, 4, 16, 8
    conv_channels = 8

    key = jax.random.PRNGKey(0)
    pkey, ikey, ckey = jax.random.split(key, 3)
    params = init_params(pkey, embed_size, hidden_size, vocab_size, num_layers,
                         in_ch, conv_channels)
    images = jax.random.normal(ikey, (batch, in_ch, spatial, spatial), dtype=jnp.float32)
    captions = jax.random.randint(ckey, (seq_len, batch), 0, vocab_size, dtype=jnp.int32)

    out = cnn_to_rnn_forward(images, captions, params)
    out = jax.block_until_ready(out)
    assert out.shape == (seq_len + 1, batch, vocab_size), out.shape

    ref = reference_forward(images, captions, params)
    max_err = float(jnp.max(jnp.abs(out - ref)))
    assert jnp.allclose(out, ref, atol=2e-3, rtol=2e-3), max_err

    print("KERNEL_OK")
</pallas_src>

<mosaic_0001>
module attributes {stable_mosaic.version = 11 : i64} {
  func.func @kernel(%arg0: i32, %arg1: memref<392x36xf32, #tpu.memory_space<vmem>>, %arg2: memref<2x392xf32, #tpu.memory_space<vmem>>, %arg3: memref<36x8xf32, #tpu.memory_space<vmem>>, %arg4: memref<1x8xf32, #tpu.memory_space<vmem>>, %arg5: memref<8x32xf32, #tpu.memory_space<vmem>>, %arg6: memref<1x32xf32, #tpu.memory_space<vmem>>, %arg7: memref<16x32xf32, #tpu.memory_space<vmem>>, %arg8: memref<32x128xf32, #tpu.memory_space<vmem>>, %arg9: memref<32x128xf32, #tpu.memory_space<vmem>>, %arg10: memref<1x128xf32, #tpu.memory_space<vmem>>, %arg11: memref<32x128xf32, #tpu.memory_space<vmem>>, %arg12: memref<32x128xf32, #tpu.memory_space<vmem>>, %arg13: memref<1x128xf32, #tpu.memory_space<vmem>>, %arg14: memref<32x128xf32, #tpu.memory_space<vmem>>, %arg15: memref<1x128xf32, #tpu.memory_space<vmem>>, %arg16: memref<18x128xf32, #tpu.memory_space<vmem>>) attributes {dimension_semantics = [#tpu.dimension_semantics<arbitrary>], iteration_bounds = array<i64: 1>, scalar_prefetch = 0 : i64, scratch_operands = 0 : i64, tpu.core_type = #tpu.core_type<tc>, window_params = [{pipeline_mode = #tpu.pipeline_mode<synchronous>, transform_indices = @transform_0, window_bounds = array<i64: 392, 36>}, {pipeline_mode = #tpu.pipeline_mode<synchronous>, transform_indices = @transform_1, window_bounds = array<i64: 2, 392>}, {pipeline_mode = #tpu.pipeline_mode<synchronous>, transform_indices = @transform_2, window_bounds = array<i64: 36, 8>}, {pipeline_mode = #tpu.pipeline_mode<synchronous>, transform_indices = @transform_3, window_bounds = array<i64: 1, 8>}, {pipeline_mode = #tpu.pipeline_mode<synchronous>, transform_indices = @transform_4, window_bounds = array<i64: 8, 32>}, {pipeline_mode = #tpu.pipeline_mode<synchronous>, transform_indices = @transform_5, window_bounds = array<i64: 1, 32>}, {pipeline_mode = #tpu.pipeline_mode<synchronous>, transform_indices = @transform_6, window_bounds = array<i64: 16, 32>}, {pipeline_mode = #tpu.pipeline_mode<synchronous>, transform_indices = @transform_7, window_bounds = array<i64: 32, 128>}, {pipeline_mode = #tpu.pipeline_mode<synchronous>, transform_indices = @transform_8, window_bounds = array<i64: 32, 128>}, {pipeline_mode = #tpu.pipeline_mode<synchronous>, transform_indices = @transform_9, window_bounds = array<i64: 1, 128>}, {pipeline_mode = #tpu.pipeline_mode<synchronous>, transform_indices = @transform_10, window_bounds = array<i64: 32, 128>}, {pipeline_mode = #tpu.pipeline_mode<synchronous>, transform_indices = @transform_11, window_bounds = array<i64: 32, 128>}, {pipeline_mode = #tpu.pipeline_mode<synchronous>, transform_indices = @transform_12, window_bounds = array<i64: 1, 128>}, {pipeline_mode = #tpu.pipeline_mode<synchronous>, transform_indices = @transform_13, window_bounds = array<i64: 32, 128>}, {pipeline_mode = #tpu.pipeline_mode<synchronous>, transform_indices = @transform_14, window_bounds = array<i64: 1, 128>}, {pipeline_mode = #tpu.pipeline_mode<synchronous>, transform_indices = @transform_15, window_bounds = array<i64: 18, 128>}]} {
    %c0 = arith.constant 0 : index
    %c0_0 = arith.constant 0 : index
    %0 = vector.load %arg1[%c0, %c0_0] : memref<392x36xf32, #tpu.memory_space<vmem>>, vector<392x36xf32>
    %c0_1 = arith.constant 0 : index
    %c0_2 = arith.constant 0 : index
    %1 = vector.load %arg3[%c0_1, %c0_2] : memref<36x8xf32, #tpu.memory_space<vmem>>, vector<36x8xf32>
    %cst = arith.constant dense<0.000000e+00> : vector<392x8xf32>
    %2 = tpu.matmul %0, %1, %cst {dimension_numbers = #tpu.dot_dimension_numbers<[1], [0], [0], [1], [0, 0, 1, 1], [], []>} : vector<392x36xf32>, vector<36x8xf32>, vector<392x8xf32> -> vector<392x8xf32>
    %c0_3 = arith.constant 0 : index
    %c0_4 = arith.constant 0 : index
    %3 = vector.load %arg4[%c0_3, %c0_4] : memref<1x8xf32, #tpu.memory_space<vmem>>, vector<1x8xf32>
    %4 = vector.broadcast %3 : vector<1x8xf32> to vector<392x8xf32>
    %5 = arith.addf %2, %4 : vector<392x8xf32>
    %cst_5 = arith.constant 0.000000e+00 : f32
    %6 = vector.broadcast %cst_5 : f32 to vector<392x8xf32>
    %7 = arith.maximumf %5, %6 : vector<392x8xf32>
    %c0_6 = arith.constant 0 : index
    %c0_7 = arith.constant 0 : index
    %8 = vector.load %arg2[%c0_6, %c0_7] : memref<2x392xf32, #tpu.memory_space<vmem>>, vector<2x392xf32>
    %cst_8 = arith.constant dense<0.000000e+00> : vector<2x8xf32>
    %9 = tpu.matmul %8, %7, %cst_8 {dimension_numbers = #tpu.dot_dimension_numbers<[1], [0], [0], [1], [0, 0, 1, 1], [], []>} : vector<2x392xf32>, vector<392x8xf32>, vector<2x8xf32> -> vector<2x8xf32>
    %c0_9 = arith.constant 0 : index
    %c0_10 = arith.constant 0 : index
    %10 = vector.load %arg5[%c0_9, %c0_10] : memref<8x32xf32, #tpu.memory_space<vmem>>, vector<8x32xf32>
    %cst_11 = arith.constant dense<0.000000e+00> : vector<2x32xf32>
    %11 = tpu.matmul %9, %10, %cst_11 {dimension_numbers = #tpu.dot_dimension_numbers<[1], [0], [0], [1], [0, 0, 1, 1], [], []>} : vector<2x8xf32>, vector<8x32xf32>, vector<2x32xf32> -> vector<2x32xf32>
    %c0_12 = arith.constant 0 : index
    %c0_13 = arith.constant 0 : index
    %12 = vector.load %arg6[%c0_12, %c0_13] : memref<1x32xf32, #tpu.memory_space<vmem>>, vector<1x32xf32>
    %13 = vector.broadcast %12 : vector<1x32xf32> to vector<2x32xf32>
    %14 = arith.addf %11, %13 : vector<2x32xf32>
    %cst_14 = arith.constant 0.000000e+00 : f32
    %15 = vector.broadcast %cst_14 : f32 to vector<2x32xf32>
    %16 = arith.maximumf %14, %15 : vector<2x32xf32>
    %c0_15 = arith.constant 0 : index
    %c0_16 = arith.constant 0 : index
    %17 = vector.load %arg7[%c0_15, %c0_16] : memref<16x32xf32, #tpu.memory_space<vmem>>, vector<16x32xf32>
    %18 = tpu.concatenate %16, %17 in 0 : vector<2x32xf32>, vector<16x32xf32> -> vector<18x32xf32>
    %c0_17 = arith.constant 0 : index
    %c0_18 = arith.constant 0 : index
    %19 = vector.load %arg8[%c0_17, %c0_18] : memref<32x128xf32, #tpu.memory_space<vmem>>, vector<32x128xf32>
    %cst_19 = arith.constant dense<0.000000e+00> : vector<18x128xf32>
    %20 = tpu.matmul %18, %19, %cst_19 {dimension_numbers = #tpu.dot_dimension_numbers<[1], [0], [0], [1], [0, 0, 1, 1], [], []>} : vector<18x32xf32>, vector<32x128xf32>, vector<18x128xf32> -> vector<18x128xf32>
    %c0_20 = arith.constant 0 : index
    %c0_21 = arith.constant 0 : index
    %21 = vector.load %arg10[%c0_20, %c0_21] : memref<1x128xf32, #tpu.memory_space<vmem>>, vector<1x128xf32>
    %22 = vector.broadcast %21 : vector<1x128xf32> to vector<18x128xf32>
    %23 = arith.addf %20, %22 : vector<18x128xf32>
    %c0_22 = arith.constant 0 : index
    %c0_23 = arith.constant 0 : index
    %24 = vector.load %arg9[%c0_22, %c0_23] : memref<32x128xf32, #tpu.memory_space<vmem>>, vector<32x128xf32>
    %cst_24 = arith.constant 0.000000e+00 : f32
    %25 = vector.broadcast %cst_24 : f32 to vector<2x32xf32>
    %cst_25 = arith.constant 0.000000e+00 : f32
    %26 = vector.broadcast %cst_25 : f32 to vector<2x32xf32>
    %27 = vector.extract_strided_slice %23 {offsets = [0, 0], sizes = [2, 128], strides = [1, 1]} : vector<18x128xf32> to vector<2x128xf32>
    %cst_26 = arith.constant dense<0.000000e+00> : vector<2x128xf32>
    %28 = tpu.matmul %25, %24, %cst_26 {dimension_numbers = #tpu.dot_dimension_numbers<[1], [0], [0], [1], [0, 0, 1, 1], [], []>} : vector<2x32xf32>, vector<32x128xf32>, vector<2x128xf32> -> vector<2x128xf32>
    %29 = arith.addf %27, %28 : vector<2x128xf32>
    %30 = vector.extract_strided_slice %29 {offsets = [0, 0], sizes = [2, 32], strides = [1, 1]} : vector<2x128xf32> to vector<2x32xf32>
    %31 = arith.negf %30 : vector<2x32xf32>
    %32 = math.exp %31 : vector<2x32xf32>
    %cst_27 = arith.constant 1.000000e+00 : f32
    %33 = vector.broadcast %cst_27 : f32 to vector<2x32xf32>
    %34 = arith.addf %33, %32 : vector<2x32xf32>
    %35 = arith.divf %33, %34 : vector<2x32xf32>
    %36 = vector.extract_strided_slice %29 {offsets = [0, 32], sizes = [2, 32], strides = [1, 1]} : vector<2x128xf32> to vector<2x32xf32>
    %37 = arith.negf %36 : vector<2x32xf32>
    %38 = math.exp %37 : vector<2x32xf32>
    %cst_28 = arith.constant 1.000000e+00 : f32
    %39 = vector.broadcast %cst_28 : f32 to vector<2x32xf32>
    %40 = arith.addf %39, %38 : vector<2x32xf32>
    %41 = arith.divf %39, %40 : vector<2x32xf32>
    %42 = vector.extract_strided_slice %29 {offsets = [0, 64], sizes = [2, 32], strides = [1, 1]} : vector<2x128xf32> to vector<2x32xf32>
    %43 = math.tanh %42 : vector<2x32xf32>
    %44 = vector.extract_strided_slice %29 {offsets = [0, 96], sizes = [2, 32], strides = [1, 1]} : vector<2x128xf32> to vector<2x32xf32>
    %45 = arith.negf %44 : vector<2x32xf32>
    %46 = math.exp %45 : vector<2x32xf32>
    %cst_29 = arith.constant 1.000000e+00 : f32
    %47 = vector.broadcast %cst_29 : f32 to vector<2x32xf32>
    %48 = arith.addf %47, %46 : vector<2x32xf32>
    %49 = arith.divf %47, %48 : vector<2x32xf32>
    %50 = arith.mulf %41, %26 : vector<2x32xf32>
    %51 = arith.mulf %35, %43 : vector<2x32xf32>
    %52 = arith.addf %50, %51 : vector<2x32xf32>
    %53 = math.tanh %52 : vector<2x32xf32>
    %54 = arith.mulf %49, %53 : vector<2x32xf32>
    %55 = vector.extract_strided_slice %23 {offsets = [2, 0], sizes = [2, 128], strides = [1, 1]} : vector<18x128xf32> to vector<2x128xf32>
    %cst_30 = arith.constant dense<0.000000e+00> : vector<2x128xf32>
    %56 = tpu.matmul %54, %24, %cst_30 {dimension_numbers = #tpu.dot_dimension_numbers<[1], [0], [0], [1], [0, 0, 1, 1], [], []>} : vector<2x32xf32>, vector<32x128xf32>, vector<2x128xf32> -> vector<2x128xf32>
    %57 = arith.addf %55, %56 : vector<2x128xf32>
    %58 = vector.extract_strided_slice %57 {offsets = [0, 0], sizes = [2, 32], strides = [1, 1]} : vector<2x128xf32> to vector<2x32xf32>
    %59 = arith.negf %58 : vector<2x32xf32>
    %60 = math.exp %59 : vector<2x32xf32>
    %cst_31 = arith.constant 1.000000e+00 : f32
    %61 = vector.broadcast %cst_31 : f32 to vector<2x32xf32>
    %62 = arith.addf %61, %60 : vector<2x32xf32>
    %63 = arith.divf %61, %62 : vector<2x32xf32>
    %64 = vector.extract_strided_slice %57 {offsets = [0, 32], sizes = [2, 32], strides = [1, 1]} : vector<2x128xf32> to vector<2x32xf32>
    %65 = arith.negf %64 : vector<2x32xf32>
    %66 = math.exp %65 : vector<2x32xf32>
    %cst_32 = arith.constant 1.000000e+00 : f32
    %67 = vector.broadcast %cst_32 : f32 to vector<2x32xf32>
    %68 = arith.addf %67, %66 : vector<2x32xf32>
    %69 = arith.divf %67, %68 : vector<2x32xf32>
    %70 = vector.extract_strided_slice %57 {offsets = [0, 64], sizes = [2, 32], strides = [1, 1]} : vector<2x128xf32> to vector<2x32xf32>
    %71 = math.tanh %70 : vector<2x32xf32>
    %72 = vector.extract_strided_slice %57 {offsets = [0, 96], sizes = [2, 32], strides = [1, 1]} : vector<2x128xf32> to vector<2x32xf32>
    %73 = arith.negf %72 : vector<2x32xf32>
    %74 = math.exp %73 : vector<2x32xf32>
    %cst_33 = arith.constant 1.000000e+00 : f32
    %75 = vector.broadcast %cst_33 : f32 to vector<2x32xf32>
    %76 = arith.addf %75, %74 : vector<2x32xf32>
    %77 = arith.divf %75, %76 : vector<2x32xf32>
    %78 = arith.mulf %69, %52 : vector<2x32xf32>
    %79 = arith.mulf %63, %71 : vector<2x32xf32>
    %80 = arith.addf %78, %79 : vector<2x32xf32>
    %81 = math.tanh %80 : vector<2x32xf32>
    %82 = arith.mulf %77, %81 : vector<2x32xf32>
    %83 = vector.extract_strided_slice %23 {offsets = [4, 0], sizes = [2, 128], strides = [1, 1]} : vector<18x128xf32> to vector<2x128xf32>
    %cst_34 = arith.constant dense<0.000000e+00> : vector<2x128xf32>
    %84 = tpu.matmul %82, %24, %cst_34 {dimension_numbers = #tpu.dot_dimension_numbers<[1], [0], [0], [1], [0, 0, 1, 1], [], []>} : vector<2x32xf32>, vector<32x128xf32>, vector<2x128xf32> -> vector<2x128xf32>
    %85 = arith.addf %83, %84 : vector<2x128xf32>
    %86 = vector.extract_strided_slice %85 {offsets = [0, 0], sizes = [2, 32], strides = [1, 1]} : vector<2x128xf32> to vector<2x32xf32>
    %87 = arith.negf %86 : vector<2x32xf32>
    %88 = math.exp %87 : vector<2x32xf32>
    %cst_35 = arith.constant 1.000000e+00 : f32
    %89 = vector.broadcast %cst_35 : f32 to vector<2x32xf32>
    %90 = arith.addf %89, %88 : vector<2x32xf32>
    %91 = arith.divf %89, %90 : vector<2x32xf32>
    %92 = vector.extract_strided_slice %85 {offsets = [0, 32], sizes = [2, 32], strides = [1, 1]} : vector<2x128xf32> to vector<2x32xf32>
    %93 = arith.negf %92 : vector<2x32xf32>
    %94 = math.exp %93 : vector<2x32xf32>
    %cst_36 = arith.constant 1.000000e+00 : f32
    %95 = vector.broadcast %cst_36 : f32 to vector<2x32xf32>
    %96 = arith.addf %95, %94 : vector<2x32xf32>
    %97 = arith.divf %95, %96 : vector<2x32xf32>
    %98 = vector.extract_strided_slice %85 {offsets = [0, 64], sizes = [2, 32], strides = [1, 1]} : vector<2x128xf32> to vector<2x32xf32>
    %99 = math.tanh %98 : vector<2x32xf32>
    %100 = vector.extract_strided_slice %85 {offsets = [0, 96], sizes = [2, 32], strides = [1, 1]} : vector<2x128xf32> to vector<2x32xf32>
    %101 = arith.negf %100 : vector<2x32xf32>
    %102 = math.exp %101 : vector<2x32xf32>
    %cst_37 = arith.constant 1.000000e+00 : f32
    %103 = vector.broadcast %cst_37 : f32 to vector<2x32xf32>
    %104 = arith.addf %103, %102 : vector<2x32xf32>
    %105 = arith.divf %103, %104 : vector<2x32xf32>
    %106 = arith.mulf %97, %80 : vector<2x32xf32>
    %107 = arith.mulf %91, %99 : vector<2x32xf32>
    %108 = arith.addf %106, %107 : vector<2x32xf32>
    %109 = math.tanh %108 : vector<2x32xf32>
    %110 = arith.mulf %105, %109 : vector<2x32xf32>
    %111 = vector.extract_strided_slice %23 {offsets = [6, 0], sizes = [2, 128], strides = [1, 1]} : vector<18x128xf32> to vector<2x128xf32>
    %cst_38 = arith.constant dense<0.000000e+00> : vector<2x128xf32>
    %112 = tpu.matmul %110, %24, %cst_38 {dimension_numbers = #tpu.dot_dimension_numbers<[1], [0], [0], [1], [0, 0, 1, 1], [], []>} : vector<2x32xf32>, vector<32x128xf32>, vector<2x128xf32> -> vector<2x128xf32>
    %113 = arith.addf %111, %112 : vector<2x128xf32>
    %114 = vector.extract_strided_slice %113 {offsets = [0, 0], sizes = [2, 32], strides = [1, 1]} : vector<2x128xf32> to vector<2x32xf32>
    %115 = arith.negf %114 : vector<2x32xf32>
    %116 = math.exp %115 : vector<2x32xf32>
    %cst_39 = arith.constant 1.000000e+00 : f32
    %117 = vector.broadcast %cst_39 : f32 to vector<2x32xf32>
    %118 = arith.addf %117, %116 : vector<2x32xf32>
    %119 = arith.divf %117, %118 : vector<2x32xf32>
    %120 = vector.extract_strided_slice %113 {offsets = [0, 32], sizes = [2, 32], strides = [1, 1]} : vector<2x128xf32> to vector<2x32xf32>
    %121 = arith.negf %120 : vector<2x32xf32>
    %122 = math.exp %121 : vector<2x32xf32>
    %cst_40 = arith.constant 1.000000e+00 : f32
    %123 = vector.broadcast %cst_40 : f32 to vector<2x32xf32>
    %124 = arith.addf %123, %122 : vector<2x32xf32>
    %125 = arith.divf %123, %124 : vector<2x32xf32>
    %126 = vector.extract_strided_slice %113 {offsets = [0, 64], sizes = [2, 32], strides = [1, 1]} : vector<2x128xf32> to vector<2x32xf32>
    %127 = math.tanh %126 : vector<2x32xf32>
    %128 = vector.extract_strided_slice %113 {offsets = [0, 96], sizes = [2, 32], strides = [1, 1]} : vector<2x128xf32> to vector<2x32xf32>
    %129 = arith.negf %128 : vector<2x32xf32>
    %130 = math.exp %129 : vector<2x32xf32>
    %cst_41 = arith.constant 1.000000e+00 : f32
    %131 = vector.broadcast %cst_41 : f32 to vector<2x32xf32>
    %132 = arith.addf %131, %130 : vector<2x32xf32>
    %133 = arith.divf %131, %132 : vector<2x32xf32>
    %134 = arith.mulf %125, %108 : vector<2x32xf32>
    %135 = arith.mulf %119, %127 : vector<2x32xf32>
    %136 = arith.addf %134, %135 : vector<2x32xf32>
    %137 = math.tanh %136 : vector<2x32xf32>
    %138 = arith.mulf %133, %137 : vector<2x32xf32>
    %139 = vector.extract_strided_slice %23 {offsets = [8, 0], sizes = [2, 128], strides = [1, 1]} : vector<18x128xf32> to vector<2x128xf32>
    %cst_42 = arith.constant dense<0.000000e+00> : vector<2x128xf32>
    %140 = tpu.matmul %138, %24, %cst_42 {dimension_numbers = #tpu.dot_dimension_numbers<[1], [0], [0], [1], [0, 0, 1, 1], [], []>} : vector<2x32xf32>, vector<32x128xf32>, vector<2x128xf32> -> vector<2x128xf32>
    %141 = arith.addf %139, %140 : vector<2x128xf32>
    %142 = vector.extract_strided_slice %141 {offsets = [0, 0], sizes = [2, 32], strides = [1, 1]} : vector<2x128xf32> to vector<2x32xf32>
    %143 = arith.negf %142 : vector<2x32xf32>
    %144 = math.exp %143 : vector<2x32xf32>
    %cst_43 = arith.constant 1.000000e+00 : f32
    %145 = vector.broadcast %cst_43 : f32 to vector<2x32xf32>
    %146 = arith.addf %145, %144 : vector<2x32xf32>
    %147 = arith.divf %145, %146 : vector<2x32xf32>
    %148 = vector.extract_strided_slice %141 {offsets = [0, 32], sizes = [2, 32], strides = [1, 1]} : vector<2x128xf32> to vector<2x32xf32>
    %149 = arith.negf %148 : vector<2x32xf32>
    %150 = math.exp %149 : vector<2x32xf32>
    %cst_44 = arith.constant 1.000000e+00 : f32
    %151 = vector.broadcast %cst_44 : f32 to vector<2x32xf32>
    %152 = arith.addf %151, %150 : vector<2x32xf32>
    %153 = arith.divf %151, %152 : vector<2x32xf32>
    %154 = vector.extract_strided_slice %141 {offsets = [0, 64], sizes = [2, 32], strides = [1, 1]} : vector<2x128xf32> to vector<2x32xf32>
    %155 = math.tanh %154 : vector<2x32xf32>
    %156 = vector.extract_strided_slice %141 {offsets = [0, 96], sizes = [2, 32], strides = [1, 1]} : vector<2x128xf32> to vector<2x32xf32>
    %157 = arith.negf %156 : vector<2x32xf32>
    %158 = math.exp %157 : vector<2x32xf32>
    %cst_45 = arith.constant 1.000000e+00 : f32
    %159 = vector.broadcast %cst_45 : f32 to vector<2x32xf32>
    %160 = arith.addf %159, %158 : vector<2x32xf32>
    %161 = arith.divf %159, %160 : vector<2x32xf32>
    %162 = arith.mulf %153, %136 : vector<2x32xf32>
    %163 = arith.mulf %147, %155 : vector<2x32xf32>
    %164 = arith.addf %162, %163 : vector<2x32xf32>
    %165 = math.tanh %164 : vector<2x32xf32>
    %166 = arith.mulf %161, %165 : vector<2x32xf32>
    %167 = vector.extract_strided_slice %23 {offsets = [10, 0], sizes = [2, 128], strides = [1, 1]} : vector<18x128xf32> to vector<2x128xf32>
    %cst_46 = arith.constant dense<0.000000e+00> : vector<2x128xf32>
    %168 = tpu.matmul %166, %24, %cst_46 {dimension_numbers = #tpu.dot_dimension_numbers<[1], [0], [0], [1], [0, 0, 1, 1], [], []>} : vector<2x32xf32>, vector<32x128xf32>, vector<2x128xf32> -> vector<2x128xf32>
    %169 = arith.addf %167, %168 : vector<2x128xf32>
    %170 = vector.extract_strided_slice %169 {offsets = [0, 0], sizes = [2, 32], strides = [1, 1]} : vector<2x128xf32> to vector<2x32xf32>
    %171 = arith.negf %170 : vector<2x32xf32>
    %172 = math.exp %171 : vector<2x32xf32>
    %cst_47 = arith.constant 1.000000e+00 : f32
    %173 = vector.broadcast %cst_47 : f32 to vector<2x32xf32>
    %174 = arith.addf %173, %172 : vector<2x32xf32>
    %175 = arith.divf %173, %174 : vector<2x32xf32>
    %176 = vector.extract_strided_slice %169 {offsets = [0, 32], sizes = [2, 32], strides = [1, 1]} : vector<2x128xf32> to vector<2x32xf32>
    %177 = arith.negf %176 : vector<2x32xf32>
    %178 = math.exp %177 : vector<2x32xf32>
    %cst_48 = arith.constant 1.000000e+00 : f32
    %179 = vector.broadcast %cst_48 : f32 to vector<2x32xf32>
    %180 = arith.addf %179, %178 : vector<2x32xf32>
    %181 = arith.divf %179, %180 : vector<2x32xf32>
    %182 = vector.extract_strided_slice %169 {offsets = [0, 64], sizes = [2, 32], strides = [1, 1]} : vector<2x128xf32> to vector<2x32xf32>
    %183 = math.tanh %182 : vector<2x32xf32>
    %184 = vector.extract_strided_slice %169 {offsets = [0, 96], sizes = [2, 32], strides = [1, 1]} : vector<2x128xf32> to vector<2x32xf32>
    %185 = arith.negf %184 : vector<2x32xf32>
    %186 = math.exp %185 : vector<2x32xf32>
    %cst_49 = arith.constant 1.000000e+00 : f32
    %187 = vector.broadcast %cst_49 : f32 to vector<2x32xf32>
    %188 = arith.addf %187, %186 : vector<2x32xf32>
    %189 = arith.divf %187, %188 : vector<2x32xf32>
    %190 = arith.mulf %181, %164 : vector<2x32xf32>
    %191 = arith.mulf %175, %183 : vector<2x32xf32>
    %192 = arith.addf %190, %191 : vector<2x32xf32>
    %193 = math.tanh %192 : vector<2x32xf32>
    %194 = arith.mulf %189, %193 : vector<2x32xf32>
    %195 = vector.extract_strided_slice %23 {offsets = [12, 0], sizes = [2, 128], strides = [1, 1]} : vector<18x128xf32> to vector<2x128xf32>
    %cst_50 = arith.constant dense<0.000000e+00> : vector<2x128xf32>
    %196 = tpu.matmul %194, %24, %cst_50 {dimension_numbers = #tpu.dot_dimension_numbers<[1], [0], [0], [1], [0, 0, 1, 1], [], []>} : vector<2x32xf32>, vector<32x128xf32>, vector<2x128xf32> -> vector<2x128xf32>
    %197 = arith.addf %195, %196 : vector<2x128xf32>
    %198 = vector.extract_strided_slice %197 {offsets = [0, 0], sizes = [2, 32], strides = [1, 1]} : vector<2x128xf32> to vector<2x32xf32>
    %199 = arith.negf %198 : vector<2x32xf32>
    %200 = math.exp %199 : vector<2x32xf32>
    %cst_51 = arith.constant 1.000000e+00 : f32
    %201 = vector.broadcast %cst_51 : f32 to vector<2x32xf32>
    %202 = arith.addf %201, %200 : vector<2x32xf32>
    %203 = arith.divf %201, %202 : vector<2x32xf32>
    %204 = vector.extract_strided_slice %197 {offsets = [0, 32], sizes = [2, 32], strides = [1, 1]} : vector<2x128xf32> to vector<2x32xf32>
    %205 = arith.negf %204 : vector<2x32xf32>
    %206 = math.exp %205 : vector<2x32xf32>
    %cst_52 = arith.constant 1.000000e+00 : f32
    %207 = vector.broadcast %cst_52 : f32 to vector<2x32xf32>
    %208 = arith.addf %207, %206 : vector<2x32xf32>
    %209 = arith.divf %207, %208 : vector<2x32xf32>
    %210 = vector.extract_strided_slice %197 {offsets = [0, 64], sizes = [2, 32], strides = [1, 1]} : vector<2x128xf32> to vector<2x32xf32>
    %211 = math.tanh %210 : vector<2x32xf32>
    %212 = vector.extract_strided_slice %197 {offsets = [0, 96], sizes = [2, 32], strides = [1, 1]} : vector<2x128xf32> to vector<2x32xf32>
    %213 = arith.negf %212 : vector<2x32xf32>
    %214 = math.exp %213 : vector<2x32xf32>
    %cst_53 = arith.constant 1.000000e+00 : f32
    %215 = vector.broadcast %cst_53 : f32 to vector<2x32xf32>
    %216 = arith.addf %215, %214 : vector<2x32xf32>
    %217 = arith.divf %215, %216 : vector<2x32xf32>
    %218 = arith.mulf %209, %192 : vector<2x32xf32>
    %219 = arith.mulf %203, %211 : vector<2x32xf32>
    %220 = arith.addf %218, %219 : vector<2x32xf32>
    %221 = math.tanh %220 : vector<2x32xf32>
    %222 = arith.mulf %217, %221 : vector<2x32xf32>
    %223 = vector.extract_strided_slice %23 {offsets = [14, 0], sizes = [2, 128], strides = [1, 1]} : vector<18x128xf32> to vector<2x128xf32>
    %cst_54 = arith.constant dense<0.000000e+00> : vector<2x128xf32>
    %224 = tpu.matmul %222, %24, %cst_54 {dimension_numbers = #tpu.dot_dimension_numbers<[1], [0], [0], [1], [0, 0, 1, 1], [], []>} : vector<2x32xf32>, vector<32x128xf32>, vector<2x128xf32> -> vector<2x128xf32>
    %225 = arith.addf %223, %224 : vector<2x128xf32>
    %226 = vector.extract_strided_slice %225 {offsets = [0, 0], sizes = [2, 32], strides = [1, 1]} : vector<2x128xf32> to vector<2x32xf32>
    %227 = arith.negf %226 : vector<2x32xf32>
    %228 = math.exp %227 : vector<2x32xf32>
    %cst_55 = arith.constant 1.000000e+00 : f32
    %229 = vector.broadcast %cst_55 : f32 to vector<2x32xf32>
    %230 = arith.addf %229, %228 : vector<2x32xf32>
    %231 = arith.divf %229, %230 : vector<2x32xf32>
    %232 = vector.extract_strided_slice %225 {offsets = [0, 32], sizes = [2, 32], strides = [1, 1]} : vector<2x128xf32> to vector<2x32xf32>
    %233 = arith.negf %232 : vector<2x32xf32>
    %234 = math.exp %233 : vector<2x32xf32>
    %cst_56 = arith.constant 1.000000e+00 : f32
    %235 = vector.broadcast %cst_56 : f32 to vector<2x32xf32>
    %236 = arith.addf %235, %234 : vector<2x32xf32>
    %237 = arith.divf %235, %236 : vector<2x32xf32>
    %238 = vector.extract_strided_slice %225 {offsets = [0, 64], sizes = [2, 32], strides = [1, 1]} : vector<2x128xf32> to vector<2x32xf32>
    %239 = math.tanh %238 : vector<2x32xf32>
    %240 = vector.extract_strided_slice %225 {offsets = [0, 96], sizes = [2, 32], strides = [1, 1]} : vector<2x128xf32> to vector<2x32xf32>
    %241 = arith.negf %240 : vector<2x32xf32>
    %242 = math.exp %241 : vector<2x32xf32>
    %cst_57 = arith.constant 1.000000e+00 : f32
    %243 = vector.broadcast %cst_57 : f32 to vector<2x32xf32>
    %244 = arith.addf %243, %242 : vector<2x32xf32>
    %245 = arith.divf %243, %244 : vector<2x32xf32>
    %246 = arith.mulf %237, %220 : vector<2x32xf32>
    %247 = arith.mulf %231, %239 : vector<2x32xf32>
    %248 = arith.addf %246, %247 : vector<2x32xf32>
    %249 = math.tanh %248 : vector<2x32xf32>
    %250 = arith.mulf %245, %249 : vector<2x32xf32>
    %251 = vector.extract_strided_slice %23 {offsets = [16, 0], sizes = [2, 128], strides = [1, 1]} : vector<18x128xf32> to vector<2x128xf32>
    %cst_58 = arith.constant dense<0.000000e+00> : vector<2x128xf32>
    %252 = tpu.matmul %250, %24, %cst_58 {dimension_numbers = #tpu.dot_dimension_numbers<[1], [0], [0], [1], [0, 0, 1, 1], [], []>} : vector<2x32xf32>, vector<32x128xf32>, vector<2x128xf32> -> vector<2x128xf32>
    %253 = arith.addf %251, %252 : vector<2x128xf32>
    %254 = vector.extract_strided_slice %253 {offsets = [0, 0], sizes = [2, 32], strides = [1, 1]} : vector<2x128xf32> to vector<2x32xf32>
    %255 = arith.negf %254 : vector<2x32xf32>
    %256 = math.exp %255 : vector<2x32xf32>
    %cst_59 = arith.constant 1.000000e+00 : f32
    %257 = vector.broadcast %cst_59 : f32 to vector<2x32xf32>
    %258 = arith.addf %257, %256 : vector<2x32xf32>
    %259 = arith.divf %257, %258 : vector<2x32xf32>
    %260 = vector.extract_strided_slice %253 {offsets = [0, 32], sizes = [2, 32], strides = [1, 1]} : vector<2x128xf32> to vector<2x32xf32>
    %261 = arith.negf %260 : vector<2x32xf32>
    %262 = math.exp %261 : vector<2x32xf32>
    %cst_60 = arith.constant 1.000000e+00 : f32
    %263 = vector.broadcast %cst_60 : f32 to vector<2x32xf32>
    %264 = arith.addf %263, %262 : vector<2x32xf32>
    %265 = arith.divf %263, %264 : vector<2x32xf32>
    %266 = vector.extract_strided_slice %253 {offsets = [0, 64], sizes = [2, 32], strides = [1, 1]} : vector<2x128xf32> to vector<2x32xf32>
    %267 = math.tanh %266 : vector<2x32xf32>
    %268 = vector.extract_strided_slice %253 {offsets = [0, 96], sizes = [2, 32], strides = [1, 1]} : vector<2x128xf32> to vector<2x32xf32>
    %269 = arith.negf %268 : vector<2x32xf32>
    %270 = math.exp %269 : vector<2x32xf32>
    %cst_61 = arith.constant 1.000000e+00 : f32
    %271 = vector.broadcast %cst_61 : f32 to vector<2x32xf32>
    %272 = arith.addf %271, %270 : vector<2x32xf32>
    %273 = arith.divf %271, %272 : vector<2x32xf32>
    %274 = arith.mulf %265, %248 : vector<2x32xf32>
    %275 = arith.mulf %259, %267 : vector<2x32xf32>
    %276 = arith.addf %274, %275 : vector<2x32xf32>
    %277 = math.tanh %276 : vector<2x32xf32>
    %278 = arith.mulf %273, %277 : vector<2x32xf32>
    %279 = tpu.concatenate %54, %82, %110, %138, %166, %194, %222, %250, %278 in 0 : vector<2x32xf32>, vector<2x32xf32>, vector<2x32xf32>, vector<2x32xf32>, vector<2x32xf32>, vector<2x32xf32>, vector<2x32xf32>, vector<2x32xf32>, vector<2x32xf32> -> vector<18x32xf32>
    %c0_62 = arith.constant 0 : index
    %c0_63 = arith.constant 0 : index
    %280 = vector.load %arg11[%c0_62, %c0_63] : memref<32x128xf32, #tpu.memory_space<vmem>>, vector<32x128xf32>
    %cst_64 = arith.constant dense<0.000000e+00> : vector<18x128xf32>
    %281 = tpu.matmul %279, %280, %cst_64 {dimension_numbers = #tpu.dot_dimension_numbers<[1], [0], [0], [1], [0, 0, 1, 1], [], []>} : vector<18x32xf32>, vector<32x128xf32>, vector<18x128xf32> -> vector<18x128xf32>
    %c0_65 = arith.constant 0 : index
    %c0_66 = arith.constant 0 : index
    %282 = vector.load %arg13[%c0_65, %c0_66] : memref<1x128xf32, #tpu.memory_space<vmem>>, vector<1x128xf32>
    %283 = vector.broadcast %282 : vector<1x128xf32> to vector<18x128xf32>
    %284 = arith.addf %281, %283 : vector<18x128xf32>
    %c0_67 = arith.constant 0 : index
    %c0_68 = arith.constant 0 : index
    %285 = vector.load %arg12[%c0_67, %c0_68] : memref<32x128xf32, #tpu.memory_space<vmem>>, vector<32x128xf32>
    %cst_69 = arith.constant 0.000000e+00 : f32
    %286 = vector.broadcast %cst_69 : f32 to vector<2x32xf32>
    %cst_70 = arith.constant 0.000000e+00 : f32
    %287 = vector.broadcast %cst_70 : f32 to vector<2x32xf32>
    %288 = vector.extract_strided_slice %284 {offsets = [0, 0], sizes = [2, 128], strides = [1, 1]} : vector<18x128xf32> to vector<2x128xf32>
    %cst_71 = arith.constant dense<0.000000e+00> : vector<2x128xf32>
    %289 = tpu.matmul %286, %285, %cst_71 {dimension_numbers = #tpu.dot_dimension_numbers<[1], [0], [0], [1], [0, 0, 1, 1], [], []>} : vector<2x32xf32>, vector<32x128xf32>, vector<2x128xf32> -> vector<2x128xf32>
    %290 = arith.addf %288, %289 : vector<2x128xf32>
    %291 = vector.extract_strided_slice %290 {offsets = [0, 0], sizes = [2, 32], strides = [1, 1]} : vector<2x128xf32> to vector<2x32xf32>
    %292 = arith.negf %291 : vector<2x32xf32>
    %293 = math.exp %292 : vector<2x32xf32>
    %cst_72 = arith.constant 1.000000e+00 : f32
    %294 = vector.broadcast %cst_72 : f32 to vector<2x32xf32>
    %295 = arith.addf %294, %293 : vector<2x32xf32>
    %296 = arith.divf %294, %295 : vector<2x32xf32>
    %297 = vector.extract_strided_slice %290 {offsets = [0, 32], sizes = [2, 32], strides = [1, 1]} : vector<2x128xf32> to vector<2x32xf32>
    %298 = arith.negf %297 : vector<2x32xf32>
    %299 = math.exp %298 : vector<2x32xf32>
    %cst_73 = arith.constant 1.000000e+00 : f32
    %300 = vector.broadcast %cst_73 : f32 to vector<2x32xf32>
    %301 = arith.addf %300, %299 : vector<2x32xf32>
    %302 = arith.divf %300, %301 : vector<2x32xf32>
    %303 = vector.extract_strided_slice %290 {offsets = [0, 64], sizes = [2, 32], strides = [1, 1]} : vector<2x128xf32> to vector<2x32xf32>
    %304 = math.tanh %303 : vector<2x32xf32>
    %305 = vector.extract_strided_slice %290 {offsets = [0, 96], sizes = [2, 32], strides = [1, 1]} : vector<2x128xf32> to vector<2x32xf32>
    %306 = arith.negf %305 : vector<2x32xf32>
    %307 = math.exp %306 : vector<2x32xf32>
    %cst_74 = arith.constant 1.000000e+00 : f32
    %308 = vector.broadcast %cst_74 : f32 to vector<2x32xf32>
    %309 = arith.addf %308, %307 : vector<2x32xf32>
    %310 = arith.divf %308, %309 : vector<2x32xf32>
    %311 = arith.mulf %302, %287 : vector<2x32xf32>
    %312 = arith.mulf %296, %304 : vector<2x32xf32>
    %313 = arith.addf %311, %312 : vector<2x32xf32>
    %314 = math.tanh %313 : vector<2x32xf32>
    %315 = arith.mulf %310, %314 : vector<2x32xf32>
    %316 = vector.extract_strided_slice %284 {offsets = [2, 0], sizes = [2, 128], strides = [1, 1]} : vector<18x128xf32> to vector<2x128xf32>
    %cst_75 = arith.constant dense<0.000000e+00> : vector<2x128xf32>
    %317 = tpu.matmul %315, %285, %cst_75 {dimension_numbers = #tpu.dot_dimension_numbers<[1], [0], [0], [1], [0, 0, 1, 1], [], []>} : vector<2x32xf32>, vector<32x128xf32>, vector<2x128xf32> -> vector<2x128xf32>
    %318 = arith.addf %316, %317 : vector<2x128xf32>
    %319 = vector.extract_strided_slice %318 {offsets = [0, 0], sizes = [2, 32], strides = [1, 1]} : vector<2x128xf32> to vector<2x32xf32>
    %320 = arith.negf %319 : vector<2x32xf32>
    %321 = math.exp %320 : vector<2x32xf32>
    %cst_76 = arith.constant 1.000000e+00 : f32
    %322 = vector.broadcast %cst_76 : f32 to vector<2x32xf32>
    %323 = arith.addf %322, %321 : vector<2x32xf32>
    %324 = arith.divf %322, %323 : vector<2x32xf32>
    %325 = vector.extract_strided_slice %318 {offsets = [0, 32], sizes = [2, 32], strides = [1, 1]} : vector<2x128xf32> to vector<2x32xf32>
    %326 = arith.negf %325 : vector<2x32xf32>
    %327 = math.exp %326 : vector<2x32xf32>
    %cst_77 = arith.constant 1.000000e+00 : f32
    %328 = vector.broadcast %cst_77 : f32 to vector<2x32xf32>
    %329 = arith.addf %328, %327 : vector<2x32xf32>
    %330 = arith.divf %328, %329 : vector<2x32xf32>
    %331 = vector.extract_strided_slice %318 {offsets = [0, 64], sizes = [2, 32], strides = [1, 1]} : vector<2x128xf32> to vector<2x32xf32>
    %332 = math.tanh %331 : vector<2x32xf32>
    %333 = vector.extract_strided_slice %318 {offsets = [0, 96], sizes = [2, 32], strides = [1, 1]} : vector<2x128xf32> to vector<2x32xf32>
    %334 = arith.negf %333 : vector<2x32xf32>
    %335 = math.exp %334 : vector<2x32xf32>
    %cst_78 = arith.constant 1.000000e+00 : f32
    %336 = vector.broadcast %cst_78 : f32 to vector<2x32xf32>
    %337 = arith.addf %336, %335 : vector<2x32xf32>
    %338 = arith.divf %336, %337 : vector<2x32xf32>
    %339 = arith.mulf %330, %313 : vector<2x32xf32>
    %340 = arith.mulf %324, %332 : vector<2x32xf32>
    %341 = arith.addf %339, %340 : vector<2x32xf32>
    %342 = math.tanh %341 : vector<2x32xf32>
    %343 = arith.mulf %338, %342 : vector<2x32xf32>
    %344 = vector.extract_strided_slice %284 {offsets = [4, 0], sizes = [2, 128], strides = [1, 1]} : vector<18x128xf32> to vector<2x128xf32>
    %cst_79 = arith.constant dense<0.000000e+00> : vector<2x128xf32>
    %345 = tpu.matmul %343, %285, %cst_79 {dimension_numbers = #tpu.dot_dimension_numbers<[1], [0], [0], [1], [0, 0, 1, 1], [], []>} : vector<2x32xf32>, vector<32x128xf32>, vector<2x128xf32> -> vector<2x128xf32>
    %346 = arith.addf %344, %345 : vector<2x128xf32>
    %347 = vector.extract_strided_slice %346 {offsets = [0, 0], sizes = [2, 32], strides = [1, 1]} : vector<2x128xf32> to vector<2x32xf32>
    %348 = arith.negf %347 : vector<2x32xf32>
    %349 = math.exp %348 : vector<2x32xf32>
    %cst_80 = arith.constant 1.000000e+00 : f32
    %350 = vector.broadcast %cst_80 : f32 to vector<2x32xf32>
    %351 = arith.addf %350, %349 : vector<2x32xf32>
    %352 = arith.divf %350, %351 : vector<2x32xf32>
    %353 = vector.extract_strided_slice %346 {offsets = [0, 32], sizes = [2, 32], strides = [1, 1]} : vector<2x128xf32> to vector<2x32xf32>
    %354 = arith.negf %353 : vector<2x32xf32>
    %355 = math.exp %354 : vector<2x32xf32>
    %cst_81 = arith.constant 1.000000e+00 : f32
    %356 = vector.broadcast %cst_81 : f32 to vector<2x32xf32>
    %357 = arith.addf %356, %355 : vector<2x32xf32>
    %358 = arith.divf %356, %357 : vector<2x32xf32>
    %359 = vector.extract_strided_slice %346 {offsets = [0, 64], sizes = [2, 32], strides = [1, 1]} : vector<2x128xf32> to vector<2x32xf32>
    %360 = math.tanh %359 : vector<2x32xf32>
    %361 = vector.extract_strided_slice %346 {offsets = [0, 96], sizes = [2, 32], strides = [1, 1]} : vector<2x128xf32> to vector<2x32xf32>
    %362 = arith.negf %361 : vector<2x32xf32>
    %363 = math.exp %362 : vector<2x32xf32>
    %cst_82 = arith.constant 1.000000e+00 : f32
    %364 = vector.broadcast %cst_82 : f32 to vector<2x32xf32>
    %365 = arith.addf %364, %363 : vector<2x32xf32>
    %366 = arith.divf %364, %365 : vector<2x32xf32>
    %367 = arith.mulf %358, %341 : vector<2x32xf32>
    %368 = arith.mulf %352, %360 : vector<2x32xf32>
    %369 = arith.addf %367, %368 : vector<2x32xf32>
    %370 = math.tanh %369 : vector<2x32xf32>
    %371 = arith.mulf %366, %370 : vector<2x32xf32>
    %372 = vector.extract_strided_slice %284 {offsets = [6, 0], sizes = [2, 128], strides = [1, 1]} : vector<18x128xf32> to vector<2x128xf32>
    %cst_83 = arith.constant dense<0.000000e+00> : vector<2x128xf32>
    %373 = tpu.matmul %371, %285, %cst_83 {dimension_numbers = #tpu.dot_dimension_numbers<[1], [0], [0], [1], [0, 0, 1, 1], [], []>} : vector<2x32xf32>, vector<32x128xf32>, vector<2x128xf32> -> vector<2x128xf32>
    %374 = arith.addf %372, %373 : vector<2x128xf32>
    %375 = vector.extract_strided_slice %374 {offsets = [0, 0], sizes = [2, 32], strides = [1, 1]} : vector<2x128xf32> to vector<2x32xf32>
    %376 = arith.negf %375 : vector<2x32xf32>
    %377 = math.exp %376 : vector<2x32xf32>
    %cst_84 = arith.constant 1.000000e+00 : f32
    %378 = vector.broadcast %cst_84 : f32 to vector<2x32xf32>
    %379 = arith.addf %378, %377 : vector<2x32xf32>
    %380 = arith.divf %378, %379 : vector<2x32xf32>
    %381 = vector.extract_strided_slice %374 {offsets = [0, 32], sizes = [2, 32], strides = [1, 1]} : vector<2x128xf32> to vector<2x32xf32>
    %382 = arith.negf %381 : vector<2x32xf32>
    %383 = math.exp %382 : vector<2x32xf32>
    %cst_85 = arith.constant 1.000000e+00 : f32
    %384 = vector.broadcast %cst_85 : f32 to vector<2x32xf32>
    %385 = arith.addf %384, %383 : vector<2x32xf32>
    %386 = arith.divf %384, %385 : vector<2x32xf32>
    %387 = vector.extract_strided_slice %374 {offsets = [0, 64], sizes = [2, 32], strides = [1, 1]} : vector<2x128xf32> to vector<2x32xf32>
    %388 = math.tanh %387 : vector<2x32xf32>
    %389 = vector.extract_strided_slice %374 {offsets = [0, 96], sizes = [2, 32], strides = [1, 1]} : vector<2x128xf32> to vector<2x32xf32>
    %390 = arith.negf %389 : vector<2x32xf32>
    %391 = math.exp %390 : vector<2x32xf32>
    %cst_86 = arith.constant 1.000000e+00 : f32
    %392 = vector.broadcast %cst_86 : f32 to vector<2x32xf32>
    %393 = arith.addf %392, %391 : vector<2x32xf32>
    %394 = arith.divf %392, %393 : vector<2x32xf32>
    %395 = arith.mulf %386, %369 : vector<2x32xf32>
    %396 = arith.mulf %380, %388 : vector<2x32xf32>
    %397 = arith.addf %395, %396 : vector<2x32xf32>
    %398 = math.tanh %397 : vector<2x32xf32>
    %399 = arith.mulf %394, %398 : vector<2x32xf32>
    %400 = vector.extract_strided_slice %284 {offsets = [8, 0], sizes = [2, 128], strides = [1, 1]} : vector<18x128xf32> to vector<2x128xf32>
    %cst_87 = arith.constant dense<0.000000e+00> : vector<2x128xf32>
    %401 = tpu.matmul %399, %285, %cst_87 {dimension_numbers = #tpu.dot_dimension_numbers<[1], [0], [0], [1], [0, 0, 1, 1], [], []>} : vector<2x32xf32>, vector<32x128xf32>, vector<2x128xf32> -> vector<2x128xf32>
    %402 = arith.addf %400, %401 : vector<2x128xf32>
    %403 = vector.extract_strided_slice %402 {offsets = [0, 0], sizes = [2, 32], strides = [1, 1]} : vector<2x128xf32> to vector<2x32xf32>
    %404 = arith.negf %403 : vector<2x32xf32>
    %405 = math.exp %404 : vector<2x32xf32>
    %cst_88 = arith.constant 1.000000e+00 : f32
    %406 = vector.broadcast %cst_88 : f32 to vector<2x32xf32>
    %407 = arith.addf %406, %405 : vector<2x32xf32>
    %408 = arith.divf %406, %407 : vector<2x32xf32>
    %409 = vector.extract_strided_slice %402 {offsets = [0, 32], sizes = [2, 32], strides = [1, 1]} : vector<2x128xf32> to vector<2x32xf32>
    %410 = arith.negf %409 : vector<2x32xf32>
    %411 = math.exp %410 : vector<2x32xf32>
    %cst_89 = arith.constant 1.000000e+00 : f32
    %412 = vector.broadcast %cst_89 : f32 to vector<2x32xf32>
    %413 = arith.addf %412, %411 : vector<2x32xf32>
    %414 = arith.divf %412, %413 : vector<2x32xf32>
    %415 = vector.extract_strided_slice %402 {offsets = [0, 64], sizes = [2, 32], strides = [1, 1]} : vector<2x128xf32> to vector<2x32xf32>
    %416 = math.tanh %415 : vector<2x32xf32>
    %417 = vector.extract_strided_slice %402 {offsets = [0, 96], sizes = [2, 32], strides = [1, 1]} : vector<2x128xf32> to vector<2x32xf32>
    %418 = arith.negf %417 : vector<2x32xf32>
    %419 = math.exp %418 : vector<2x32xf32>
    %cst_90 = arith.constant 1.000000e+00 : f32
    %420 = vector.broadcast %cst_90 : f32 to vector<2x32xf32>
    %421 = arith.addf %420, %419 : vector<2x32xf32>
    %422 = arith.divf %420, %421 : vector<2x32xf32>
    %423 = arith.mulf %414, %397 : vector<2x32xf32>
    %424 = arith.mulf %408, %416 : vector<2x32xf32>
    %425 = arith.addf %423, %424 : vector<2x32xf32>
    %426 = math.tanh %425 : vector<2x32xf32>
    %427 = arith.mulf %422, %426 : vector<2x32xf32>
    %428 = vector.extract_strided_slice %284 {offsets = [10, 0], sizes = [2, 128], strides = [1, 1]} : vector<18x128xf32> to vector<2x128xf32>
    %cst_91 = arith.constant dense<0.000000e+00> : vector<2x128xf32>
    %429 = tpu.matmul %427, %285, %cst_91 {dimension_numbers = #tpu.dot_dimension_numbers<[1], [0], [0], [1], [0, 0, 1, 1], [], []>} : vector<2x32xf32>, vector<32x128xf32>, vector<2x128xf32> -> vector<2x128xf32>
    %430 = arith.addf %428, %429 : vector<2x128xf32>
    %431 = vector.extract_strided_slice %430 {offsets = [0, 0], sizes = [2, 32], strides = [1, 1]} : vector<2x128xf32> to vector<2x32xf32>
    %432 = arith.negf %431 : vector<2x32xf32>
    %433 = math.exp %432 : vector<2x32xf32>
    %cst_92 = arith.constant 1.000000e+00 : f32
    %434 = vector.broadcast %cst_92 : f32 to vector<2x32xf32>
    %435 = arith.addf %434, %433 : vector<2x32xf32>
    %436 = arith.divf %434, %435 : vector<2x32xf32>
    %437 = vector.extract_strided_slice %430 {offsets = [0, 32], sizes = [2, 32], strides = [1, 1]} : vector<2x128xf32> to vector<2x32xf32>
    %438 = arith.negf %437 : vector<2x32xf32>
    %439 = math.exp %438 : vector<2x32xf32>
    %cst_93 = arith.constant 1.000000e+00 : f32
    %440 = vector.broadcast %cst_93 : f32 to vector<2x32xf32>
    %441 = arith.addf %440, %439 : vector<2x32xf32>
    %442 = arith.divf %440, %441 : vector<2x32xf32>
    %443 = vector.extract_strided_slice %430 {offsets = [0, 64], sizes = [2, 32], strides = [1, 1]} : vector<2x128xf32> to vector<2x32xf32>
    %444 = math.tanh %443 : vector<2x32xf32>
    %445 = vector.extract_strided_slice %430 {offsets = [0, 96], sizes = [2, 32], strides = [1, 1]} : vector<2x128xf32> to vector<2x32xf32>
    %446 = arith.negf %445 : vector<2x32xf32>
    %447 = math.exp %446 : vector<2x32xf32>
    %cst_94 = arith.constant 1.000000e+00 : f32
    %448 = vector.broadcast %cst_94 : f32 to vector<2x32xf32>
    %449 = arith.addf %448, %447 : vector<2x32xf32>
    %450 = arith.divf %448, %449 : vector<2x32xf32>
    %451 = arith.mulf %442, %425 : vector<2x32xf32>
    %452 = arith.mulf %436, %444 : vector<2x32xf32>
    %453 = arith.addf %451, %452 : vector<2x32xf32>
    %454 = math.tanh %453 : vector<2x32xf32>
    %455 = arith.mulf %450, %454 : vector<2x32xf32>
    %456 = vector.extract_strided_slice %284 {offsets = [12, 0], sizes = [2, 128], strides = [1, 1]} : vector<18x128xf32> to vector<2x128xf32>
    %cst_95 = arith.constant dense<0.000000e+00> : vector<2x128xf32>
    %457 = tpu.matmul %455, %285, %cst_95 {dimension_numbers = #tpu.dot_dimension_numbers<[1], [0], [0], [1], [0, 0, 1, 1], [], []>} : vector<2x32xf32>, vector<32x128xf32>, vector<2x128xf32> -> vector<2x128xf32>
    %458 = arith.addf %456, %457 : vector<2x128xf32>
    %459 = vector.extract_strided_slice %458 {offsets = [0, 0], sizes = [2, 32], strides = [1, 1]} : vector<2x128xf32> to vector<2x32xf32>
    %460 = arith.negf %459 : vector<2x32xf32>
    %461 = math.exp %460 : vector<2x32xf32>
    %cst_96 = arith.constant 1.000000e+00 : f32
    %462 = vector.broadcast %cst_96 : f32 to vector<2x32xf32>
    %463 = arith.addf %462, %461 : vector<2x32xf32>
    %464 = arith.divf %462, %463 : vector<2x32xf32>
    %465 = vector.extract_strided_slice %458 {offsets = [0, 32], sizes = [2, 32], strides = [1, 1]} : vector<2x128xf32> to vector<2x32xf32>
    %466 = arith.negf %465 : vector<2x32xf32>
    %467 = math.exp %466 : vector<2x32xf32>
    %cst_97 = arith.constant 1.000000e+00 : f32
    %468 = vector.broadcast %cst_97 : f32 to vector<2x32xf32>
    %469 = arith.addf %468, %467 : vector<2x32xf32>
    %470 = arith.divf %468, %469 : vector<2x32xf32>
    %471 = vector.extract_strided_slice %458 {offsets = [0, 64], sizes = [2, 32], strides = [1, 1]} : vector<2x128xf32> to vector<2x32xf32>
    %472 = math.tanh %471 : vector<2x32xf32>
    %473 = vector.extract_strided_slice %458 {offsets = [0, 96], sizes = [2, 32], strides = [1, 1]} : vector<2x128xf32> to vector<2x32xf32>
    %474 = arith.negf %473 : vector<2x32xf32>
    %475 = math.exp %474 : vector<2x32xf32>
    %cst_98 = arith.constant 1.000000e+00 : f32
    %476 = vector.broadcast %cst_98 : f32 to vector<2x32xf32>
    %477 = arith.addf %476, %475 : vector<2x32xf32>
    %478 = arith.divf %476, %477 : vector<2x32xf32>
    %479 = arith.mulf %470, %453 : vector<2x32xf32>
    %480 = arith.mulf %464, %472 : vector<2x32xf32>
    %481 = arith.addf %479, %480 : vector<2x32xf32>
    %482 = math.tanh %481 : vector<2x32xf32>
    %483 = arith.mulf %478, %482 : vector<2x32xf32>
    %484 = vector.extract_strided_slice %284 {offsets = [14, 0], sizes = [2, 128], strides = [1, 1]} : vector<18x128xf32> to vector<2x128xf32>
    %cst_99 = arith.constant dense<0.000000e+00> : vector<2x128xf32>
    %485 = tpu.matmul %483, %285, %cst_99 {dimension_numbers = #tpu.dot_dimension_numbers<[1], [0], [0], [1], [0, 0, 1, 1], [], []>} : vector<2x32xf32>, vector<32x128xf32>, vector<2x128xf32> -> vector<2x128xf32>
    %486 = arith.addf %484, %485 : vector<2x128xf32>
    %487 = vector.extract_strided_slice %486 {offsets = [0, 0], sizes = [2, 32], strides = [1, 1]} : vector<2x128xf32> to vector<2x32xf32>
    %488 = arith.negf %487 : vector<2x32xf32>
    %489 = math.exp %488 : vector<2x32xf32>
    %cst_100 = arith.constant 1.000000e+00 : f32
    %490 = vector.broadcast %cst_100 : f32 to vector<2x32xf32>
    %491 = arith.addf %490, %489 : vector<2x32xf32>
    %492 = arith.divf %490, %491 : vector<2x32xf32>
    %493 = vector.extract_strided_slice %486 {offsets = [0, 32], sizes = [2, 32], strides = [1, 1]} : vector<2x128xf32> to vector<2x32xf32>
    %494 = arith.negf %493 : vector<2x32xf32>
    %495 = math.exp %494 : vector<2x32xf32>
    %cst_101 = arith.constant 1.000000e+00 : f32
    %496 = vector.broadcast %cst_101 : f32 to vector<2x32xf32>
    %497 = arith.addf %496, %495 : vector<2x32xf32>
    %498 = arith.divf %496, %497 : vector<2x32xf32>
    %499 = vector.extract_strided_slice %486 {offsets = [0, 64], sizes = [2, 32], strides = [1, 1]} : vector<2x128xf32> to vector<2x32xf32>
    %500 = math.tanh %499 : vector<2x32xf32>
    %501 = vector.extract_strided_slice %486 {offsets = [0, 96], sizes = [2, 32], strides = [1, 1]} : vector<2x128xf32> to vector<2x32xf32>
    %502 = arith.negf %501 : vector<2x32xf32>
    %503 = math.exp %502 : vector<2x32xf32>
    %cst_102 = arith.constant 1.000000e+00 : f32
    %504 = vector.broadcast %cst_102 : f32 to vector<2x32xf32>
    %505 = arith.addf %504, %503 : vector<2x32xf32>
    %506 = arith.divf %504, %505 : vector<2x32xf32>
    %507 = arith.mulf %498, %481 : vector<2x32xf32>
    %508 = arith.mulf %492, %500 : vector<2x32xf32>
    %509 = arith.addf %507, %508 : vector<2x32xf32>
    %510 = math.tanh %509 : vector<2x32xf32>
    %511 = arith.mulf %506, %510 : vector<2x32xf32>
    %512 = vector.extract_strided_slice %284 {offsets = [16, 0], sizes = [2, 128], strides = [1, 1]} : vector<18x128xf32> to vector<2x128xf32>
    %cst_103 = arith.constant dense<0.000000e+00> : vector<2x128xf32>
    %513 = tpu.matmul %511, %285, %cst_103 {dimension_numbers = #tpu.dot_dimension_numbers<[1], [0], [0], [1], [0, 0, 1, 1], [], []>} : vector<2x32xf32>, vector<32x128xf32>, vector<2x128xf32> -> vector<2x128xf32>
    %514 = arith.addf %512, %513 : vector<2x128xf32>
    %515 = vector.extract_strided_slice %514 {offsets = [0, 0], sizes = [2, 32], strides = [1, 1]} : vector<2x128xf32> to vector<2x32xf32>
    %516 = arith.negf %515 : vector<2x32xf32>
    %517 = math.exp %516 : vector<2x32xf32>
    %cst_104 = arith.constant 1.000000e+00 : f32
    %518 = vector.broadcast %cst_104 : f32 to vector<2x32xf32>
    %519 = arith.addf %518, %517 : vector<2x32xf32>
    %520 = arith.divf %518, %519 : vector<2x32xf32>
    %521 = vector.extract_strided_slice %514 {offsets = [0, 32], sizes = [2, 32], strides = [1, 1]} : vector<2x128xf32> to vector<2x32xf32>
    %522 = arith.negf %521 : vector<2x32xf32>
    %523 = math.exp %522 : vector<2x32xf32>
    %cst_105 = arith.constant 1.000000e+00 : f32
    %524 = vector.broadcast %cst_105 : f32 to vector<2x32xf32>
    %525 = arith.addf %524, %523 : vector<2x32xf32>
    %526 = arith.divf %524, %525 : vector<2x32xf32>
    %527 = vector.extract_strided_slice %514 {offsets = [0, 64], sizes = [2, 32], strides = [1, 1]} : vector<2x128xf32> to vector<2x32xf32>
    %528 = math.tanh %527 : vector<2x32xf32>
    %529 = vector.extract_strided_slice %514 {offsets = [0, 96], sizes = [2, 32], strides = [1, 1]} : vector<2x128xf32> to vector<2x32xf32>
    %530 = arith.negf %529 : vector<2x32xf32>
    %531 = math.exp %530 : vector<2x32xf32>
    %cst_106 = arith.constant 1.000000e+00 : f32
    %532 = vector.broadcast %cst_106 : f32 to vector<2x32xf32>
    %533 = arith.addf %532, %531 : vector<2x32xf32>
    %534 = arith.divf %532, %533 : vector<2x32xf32>
    %535 = arith.mulf %526, %509 : vector<2x32xf32>
    %536 = arith.mulf %520, %528 : vector<2x32xf32>
    %537 = arith.addf %535, %536 : vector<2x32xf32>
    %538 = math.tanh %537 : vector<2x32xf32>
    %539 = arith.mulf %534, %538 : vector<2x32xf32>
    %540 = tpu.concatenate %315, %343, %371, %399, %427, %455, %483, %511, %539 in 0 : vector<2x32xf32>, vector<2x32xf32>, vector<2x32xf32>, vector<2x32xf32>, vector<2x32xf32>, vector<2x32xf32>, vector<2x32xf32>, vector<2x32xf32>, vector<2x32xf32> -> vector<18x32xf32>
    %c0_107 = arith.constant 0 : index
    %c0_108 = arith.constant 0 : index
    %541 = vector.load %arg14[%c0_107, %c0_108] : memref<32x128xf32, #tpu.memory_space<vmem>>, vector<32x128xf32>
    %cst_109 = arith.constant dense<0.000000e+00> : vector<18x128xf32>
    %542 = tpu.matmul %540, %541, %cst_109 {dimension_numbers = #tpu.dot_dimension_numbers<[1], [0], [0], [1], [0, 0, 1, 1], [], []>} : vector<18x32xf32>, vector<32x128xf32>, vector<18x128xf32> -> vector<18x128xf32>
    %c0_110 = arith.constant 0 : index
    %c0_111 = arith.constant 0 : index
    %543 = vector.load %arg15[%c0_110, %c0_111] : memref<1x128xf32, #tpu.memory_space<vmem>>, vector<1x128xf32>
    %544 = vector.broadcast %543 : vector<1x128xf32> to vector<18x128xf32>
    %545 = arith.addf %542, %544 : vector<18x128xf32>
    %c0_112 = arith.constant 0 : index
    %c0_113 = arith.constant 0 : index
    %546 = vector.load %arg16[%c0_112, %c0_113] : memref<18x128xf32, #tpu.memory_space<vmem>>, vector<18x128xf32>
    tpu.vector_store %arg16[%c0_112, %c0_113], %545 {strides = array<i32>} : memref<18x128xf32, #tpu.memory_space<vmem>>, vector<18x128xf32>,
    return
  }
  func.func @transform_0(%arg0: i32) -> (i32, i32) {
    %c0_i32 = arith.constant 0 : i32
    %c0_i32_0 = arith.constant 0 : i32
    %c0_i32_1 = arith.constant 0 : i32
    return %c0_i32, %c0_i32_0 : i32, i32
  }
  func.func @transform_1(%arg0: i32) -> (i32, i32) {
    %c0_i32 = arith.constant 0 : i32
    %c0_i32_0 = arith.constant 0 : i32
    %c0_i32_1 = arith.constant 0 : i32
    return %c0_i32, %c0_i32_0 : i32, i32
  }
  func.func @transform_2(%arg0: i32) -> (i32, i32) {
    %c0_i32 = arith.constant 0 : i32
    %c0_i32_0 = arith.constant 0 : i32
    %c0_i32_1 = arith.constant 0 : i32
    return %c0_i32, %c0_i32_0 : i32, i32
  }
  func.func @transform_3(%arg0: i32) -> (i32, i32) {
    %c0_i32 = arith.constant 0 : i32
    %c0_i32_0 = arith.constant 0 : i32
    %c0_i32_1 = arith.constant 0 : i32
    return %c0_i32, %c0_i32_0 : i32, i32
  }
  func.func @transform_4(%arg0: i32) -> (i32, i32) {
    %c0_i32 = arith.constant 0 : i32
    %c0_i32_0 = arith.constant 0 : i32
    %c0_i32_1 = arith.constant 0 : i32
    return %c0_i32, %c0_i32_0 : i32, i32
  }
  func.func @transform_5(%arg0: i32) -> (i32, i32) {
    %c0_i32 = arith.constant 0 : i32
    %c0_i32_0 = arith.constant 0 : i32
    %c0_i32_1 = arith.constant 0 : i32
    return %c0_i32, %c0_i32_0 : i32, i32
  }
  func.func @transform_6(%arg0: i32) -> (i32, i32) {
    %c0_i32 = arith.constant 0 : i32
    %c0_i32_0 = arith.constant 0 : i32
    %c0_i32_1 = arith.constant 0 : i32
    return %c0_i32, %c0_i32_0 : i32, i32
  }
  func.func @transform_7(%arg0: i32) -> (i32, i32) {
    %c0_i32 = arith.constant 0 : i32
    %c0_i32_0 = arith.constant 0 : i32
    %c0_i32_1 = arith.constant 0 : i32
    return %c0_i32, %c0_i32_0 : i32, i32
  }
  func.func @transform_8(%arg0: i32) -> (i32, i32) {
    %c0_i32 = arith.constant 0 : i32
    %c0_i32_0 = arith.constant 0 : i32
    %c0_i32_1 = arith.constant 0 : i32
    return %c0_i32, %c0_i32_0 : i32, i32
  }
  func.func @transform_9(%arg0: i32) -> (i32, i32) {
    %c0_i32 = arith.constant 0 : i32
    %c0_i32_0 = arith.constant 0 : i32
    %c0_i32_1 = arith.constant 0 : i32
    return %c0_i32, %c0_i32_0 : i32, i32
  }
  func.func @transform_10(%arg0: i32) -> (i32, i32) {
    %c0_i32 = arith.constant 0 : i32
    %c0_i32_0 = arith.constant 0 : i32
    %c0_i32_1 = arith.constant 0 : i32
    return %c0_i32, %c0_i32_0 : i32, i32
  }
  func.func @transform_11(%arg0: i32) -> (i32, i32) {
    %c0_i32 = arith.constant 0 : i32
    %c0_i32_0 = arith.constant 0 : i32
    %c0_i32_1 = arith.constant 0 : i32
    return %c0_i32, %c0_i32_0 : i32, i32
  }
  func.func @transform_12(%arg0: i32) -> (i32, i32) {
    %c0_i32 = arith.constant 0 : i32
    %c0_i32_0 = arith.constant 0 : i32
    %c0_i32_1 = arith.constant 0 : i32
    return %c0_i32, %c0_i32_0 : i32, i32
  }
  func.func @transform_13(%arg0: i32) -> (i32, i32) {
    %c0_i32 = arith.constant 0 : i32
    %c0_i32_0 = arith.constant 0 : i32
    %c0_i32_1 = arith.constant 0 : i32
    return %c0_i32, %c0_i32_0 : i32, i32
  }
  func.func @transform_14(%arg0: i32) -> (i32, i32) {
    %c0_i32 = arith.constant 0 : i32
    %c0_i32_0 = arith.constant 0 : i32
    %c0_i32_1 = arith.constant 0 : i32
    return %c0_i32, %c0_i32_0 : i32, i32
  }
  func.func @transform_15(%arg0: i32) -> (i32, i32) {
    %c0_i32 = arith.constant 0 : i32
    %c0_i32_0 = arith.constant 0 : i32
    %c0_i32_1 = arith.constant 0 : i32
    return %c0_i32, %c0_i32_0 : i32, i32
  }
}

</mosaic_0001>

<llo_original>
// kernel: tpu_custom_call.1
$region0: #{tpu_custom_call.1}
  #allocation0 [shape = 'u32[]', space=smem, size = 0x4, offset = 0x4, fixed_abs, tag = 'smem constant byte address 0x4 - core index']
  #allocation1 [shape = 'u32[72,128]{1,0:T(1,128)}', space=vmem, size = 0x9000, scoped, tag = 'internal scratch']
  %s0 = inlined_call_operand.vmem [shape: f32[392,36], index: 0, kind: input, shape index: {}]
  %s1 = inlined_call_operand.vmem [shape: f32[2,392], index: 1, kind: input, shape index: {}]
  %s2 = inlined_call_operand.vmem [shape: f32[36,8], index: 2, kind: input, shape index: {}]
  %s3 = inlined_call_operand.vmem [shape: f32[1,8], index: 3, kind: input, shape index: {}]
  %s4 = inlined_call_operand.vmem [shape: f32[8,32], index: 4, kind: input, shape index: {}]
  %s5 = inlined_call_operand.vmem [shape: f32[1,32], index: 5, kind: input, shape index: {}]
  %s6 = inlined_call_operand.vmem [shape: f32[16,32], index: 6, kind: input, shape index: {}]
  %s7 = inlined_call_operand.vmem [shape: f32[32,128], index: 7, kind: input, shape index: {}]
  %s8 = inlined_call_operand.vmem [shape: f32[32,128], index: 8, kind: input, shape index: {}]
  %s9 = inlined_call_operand.vmem [shape: f32[1,128], index: 9, kind: input, shape index: {}]
  %s10 = inlined_call_operand.vmem [shape: f32[32,128], index: 10, kind: input, shape index: {}]
  %s11 = inlined_call_operand.vmem [shape: f32[32,128], index: 11, kind: input, shape index: {}]
  %s12 = inlined_call_operand.vmem [shape: f32[1,128], index: 12, kind: input, shape index: {}]
  %s13 = inlined_call_operand.vmem [shape: f32[32,128], index: 13, kind: input, shape index: {}]
  %s14 = inlined_call_operand.vmem [shape: f32[1,128], index: 14, kind: input, shape index: {}]
  %s15 = inlined_call_operand.hbm [shape: f32[18,128], index: 15, kind: output, shape index: {}]
  %s16 = sld [smem:[#allocation0]]
  $region70: #{tpu_custom_call.1} parent=0
    _
  %s18 = ssub.s32 1, %s16
  %s19 = scalar_select 0, %s18, %s16
  $region1: #{tpu_custom_call.1} parent=0
    #allocation2 [shape = 'u8[12288]{0}', space=vmem, size = 0x3000, scoped, tag = 'output window, operand 0, single buffered']
    #allocation3 [shape = 's32[1]{0}', space=sflag, size = 0x4, scoped, tag = 'scoped memory for tpu_custom_call.1']
    %20 = vsyncpa [#allocation3], 0
    // Predicated region
    $region2: #{tpu_custom_call.1} parent=1 // pred_check
      _
    $region3: #{tpu_custom_call.1} parent=1 // pred_check_branch
      %22 = sbr.rel (0) target = $region5
    $region4: #{tpu_custom_call.1} parent=1 // pred_region
      _
    $region5: #{tpu_custom_call.1} parent=1 // pred_fallthru
      _
    // Predicated region
    $region6: #{tpu_custom_call.1} parent=1 // pred_check
      _
    $region7: #{tpu_custom_call.1} parent=1 // pred_check_branch
      %24 = sbr.rel (0) target = $region9
    $region8: #{tpu_custom_call.1} parent=1 // pred_region
      _
    $region9: #{tpu_custom_call.1} parent=1 // pred_fallthru
      _
    // Predicated region
    $region10: #{tpu_custom_call.1} parent=1 // pred_check
      _
    $region11: #{tpu_custom_call.1} parent=1 // pred_check_branch
      %26 = sbr.rel (0) target = $region13
    $region12: #{tpu_custom_call.1} parent=1 // pred_region
      _
    $region13: #{tpu_custom_call.1} parent=1 // pred_fallthru
      _
    // Predicated region
    $region14: #{tpu_custom_call.1} parent=1 // pred_check
      _
    $region15: #{tpu_custom_call.1} parent=1 // pred_check_branch
      %28 = sbr.rel (0) target = $region17
    $region16: #{tpu_custom_call.1} parent=1 // pred_region
      _
    $region17: #{tpu_custom_call.1} parent=1 // pred_fallthru
      _
    // Predicated region
    $region18: #{tpu_custom_call.1} parent=1 // pred_check
      _
    $region19: #{tpu_custom_call.1} parent=1 // pred_check_branch
      %30 = sbr.rel (0) target = $region21
    $region20: #{tpu_custom_call.1} parent=1 // pred_region
      _
    $region21: #{tpu_custom_call.1} parent=1 // pred_fallthru
      _
    // Predicated region
    $region22: #{tpu_custom_call.1} parent=1 // pred_check
      _
    $region23: #{tpu_custom_call.1} parent=1 // pred_check_branch
      %32 = sbr.rel (0) target = $region25
    $region24: #{tpu_custom_call.1} parent=1 // pred_region
      _
    $region25: #{tpu_custom_call.1} parent=1 // pred_fallthru
      _
    // Predicated region
    $region26: #{tpu_custom_call.1} parent=1 // pred_check
      _
    $region27: #{tpu_custom_call.1} parent=1 // pred_check_branch
      %34 = sbr.rel (0) target = $region29
    $region28: #{tpu_custom_call.1} parent=1 // pred_region
      _
    $region29: #{tpu_custom_call.1} parent=1 // pred_fallthru
      _
    // Predicated region
    $region30: #{tpu_custom_call.1} parent=1 // pred_check
      _
    $region31: #{tpu_custom_call.1} parent=1 // pred_check_branch
      %36 = sbr.rel (0) target = $region33
    $region32: #{tpu_custom_call.1} parent=1 // pred_region
      _
    $region33: #{tpu_custom_call.1} parent=1 // pred_fallthru
      _
    // Predicated region
    $region34: #{tpu_custom_call.1} parent=1 // pred_check
      _
    $region35: #{tpu_custom_call.1} parent=1 // pred_check_branch
      %38 = sbr.rel (0) target = $region37
    $region36: #{tpu_custom_call.1} parent=1 // pred_region
      _
    $region37: #{tpu_custom_call.1} parent=1 // pred_fallthru
      _
    // Predicated region
    $region38: #{tpu_custom_call.1} parent=1 // pred_check
      _
    $region39: #{tpu_custom_call.1} parent=1 // pred_check_branch
      %40 = sbr.rel (0) target = $region41
    $region40: #{tpu_custom_call.1} parent=1 // pred_region
      _
    $region41: #{tpu_custom_call.1} parent=1 // pred_fallthru
      _
    // Predicated region
    $region42: #{tpu_custom_call.1} parent=1 // pred_check
      _
    $region43: #{tpu_custom_call.1} parent=1 // pred_check_branch
      %42 = sbr.rel (0) target = $region45
    $region44: #{tpu_custom_call.1} parent=1 // pred_region
      _
    $region45: #{tpu_custom_call.1} parent=1 // pred_fallthru
      _
    // Predicated region
    $region46: #{tpu_custom_call.1} parent=1 // pred_check
      _
    $region47: #{tpu_custom_call.1} parent=1 // pred_check_branch
      %44 = sbr.rel (0) target = $region49
    $region48: #{tpu_custom_call.1} parent=1 // pred_region
      _
    $region49: #{tpu_custom_call.1} parent=1 // pred_fallthru
      _
    // Predicated region
    $region50: #{tpu_custom_call.1} parent=1 // pred_check
      _
    $region51: #{tpu_custom_call.1} parent=1 // pred_check_branch
      %46 = sbr.rel (0) target = $region53
    $region52: #{tpu_custom_call.1} parent=1 // pred_region
      _
    $region53: #{tpu_custom_call.1} parent=1 // pred_fallthru
      _
    // Predicated region
    $region54: #{tpu_custom_call.1} parent=1 // pred_check
      _
    $region55: #{tpu_custom_call.1} parent=1 // pred_check_branch
      %48 = sbr.rel (0) target = $region57
    $region56: #{tpu_custom_call.1} parent=1 // pred_region
      _
    $region57: #{tpu_custom_call.1} parent=1 // pred_fallthru
      _
    // Predicated region
    $region58: #{tpu_custom_call.1} parent=1 // pred_check
      _
    $region59: #{tpu_custom_call.1} parent=1 // pred_check_branch
      %50 = sbr.rel (0) target = $region61
    $region60: #{tpu_custom_call.1} parent=1 // pred_region
      _
    $region61: #{tpu_custom_call.1} parent=1 // pred_fallthru
      _
    %v51 = vld [vmem:[%s0] sm:$0xff]
    %v52 = vld [vmem:[%s0 + $0x8] sm:$0xff]
    %v53 = vld [vmem:[%s0 + $0x10] sm:$0xff]
    %v54 = vld [vmem:[%s0 + $0x18] sm:$0xff]
    %v55 = vld [vmem:[%s0 + $0x20] sm:$0xff]
    %v56 = vld [vmem:[%s0 + $0x28] sm:$0xff]
    %v57 = vld [vmem:[%s0 + $0x30] sm:$0xff]
    %v58 = vld [vmem:[%s0 + $0x38] sm:$0xff]
    %v59 = vld [vmem:[%s0 + $0x40] sm:$0xff]
    %v60 = vld [vmem:[%s0 + $0x48] sm:$0xff]
    %v61 = vld [vmem:[%s0 + $0x50] sm:$0xff]
    %v62 = vld [vmem:[%s0 + $0x58] sm:$0xff]
    %v63 = vld [vmem:[%s0 + $0x60] sm:$0xff]
    %v64 = vld [vmem:[%s0 + $0x68] sm:$0xff]
    %v65 = vld [vmem:[%s0 + $0x70] sm:$0xff]
    %v66 = vld [vmem:[%s0 + $0x78] sm:$0xff]
    %v67 = vld [vmem:[%s0 + $0x80] sm:$0xff]
    %v68 = vld [vmem:[%s0 + $0x88] sm:$0xff]
    %v69 = vld [vmem:[%s0 + $0x90] sm:$0xff]
    %v70 = vld [vmem:[%s0 + $0x98] sm:$0xff]
    %v71 = vld [vmem:[%s0 + $0xa0] sm:$0xff]
    %v72 = vld [vmem:[%s0 + $0xa8] sm:$0xff]
    %v73 = vld [vmem:[%s0 + $0xb0] sm:$0xff]
    %v74 = vld [vmem:[%s0 + $0xb8] sm:$0xff]
    %v75 = vld [vmem:[%s0 + $0xc0] sm:$0xff]
    %v76 = vld [vmem:[%s0 + $0xc8] sm:$0xff]
    %v77 = vld [vmem:[%s0 + $0xd0] sm:$0xff]
    %v78 = vld [vmem:[%s0 + $0xd8] sm:$0xff]
    %v79 = vld [vmem:[%s0 + $0xe0] sm:$0xff]
    %v80 = vld [vmem:[%s0 + $0xe8] sm:$0xff]
    %v81 = vld [vmem:[%s0 + $0xf0] sm:$0xff]
    %v82 = vld [vmem:[%s0 + $0xf8] sm:$0xff]
    %v83 = vld [vmem:[%s0 + $0x100] sm:$0xff]
    %v84 = vld [vmem:[%s0 + $0x108] sm:$0xff]
    %v85 = vld [vmem:[%s0 + $0x110] sm:$0xff]
    %v86 = vld [vmem:[%s0 + $0x118] sm:$0xff]
    %v87 = vld [vmem:[%s0 + $0x120] sm:$0xff]
    %v88 = vld [vmem:[%s0 + $0x128] sm:$0xff]
    %v89 = vld [vmem:[%s0 + $0x130] sm:$0xff]
    %v90 = vld [vmem:[%s0 + $0x138] sm:$0xff]
    %v91 = vld [vmem:[%s0 + $0x140] sm:$0xff]
    %v92 = vld [vmem:[%s0 + $0x148] sm:$0xff]
    %v93 = vld [vmem:[%s0 + $0x150] sm:$0xff]
    %v94 = vld [vmem:[%s0 + $0x158] sm:$0xff]
    %v95 = vld [vmem:[%s0 + $0x160] sm:$0xff]
    %v96 = vld [vmem:[%s0 + $0x168] sm:$0xff]
    %v97 = vld [vmem:[%s0 + $0x170] sm:$0xff]
    %v98 = vld [vmem:[%s0 + $0x178] sm:$0xff]
    %v99 = vld [vmem:[%s0 + $0x180] sm:$0xff]
    %v100 = vld [vmem:[%s2] sm:$0xff]
    %v101 = vld [vmem:[%s2 + $0x8] sm:$0xff]
    %v102 = vld [vmem:[%s2 + $0x10] sm:$0xff]
    %v103 = vld [vmem:[%s2 + $0x18] sm:$0xff]
    %v104 = vld [vmem:[%s2 + $0x20] sm:$0xf]
    %v105 = vld [vmem:[%s3] sm:$0x1]
    %v107 = vperm.slane %v105, 0
    %vm109 = vcmask 293888
    %v111 = vsel %vm109, %v51, 0
    %v114 = vsel %vm109, %v52, 0
    %v117 = vsel %vm109, %v53, 0
    %v120 = vsel %vm109, %v54, 0
    %v123 = vsel %vm109, %v55, 0
    %v126 = vsel %vm109, %v56, 0
    %v129 = vsel %vm109, %v57, 0
    %v132 = vsel %vm109, %v58, 0
    %v135 = vsel %vm109, %v59, 0
    %v138 = vsel %vm109, %v60, 0
    %v141 = vsel %vm109, %v61, 0
    %v144 = vsel %vm109, %v62, 0
    %v147 = vsel %vm109, %v63, 0
    %v150 = vsel %vm109, %v64, 0
    %v153 = vsel %vm109, %v65, 0
    %v156 = vsel %vm109, %v66, 0
    %v159 = vsel %vm109, %v67, 0
    %v162 = vsel %vm109, %v68, 0
    %v165 = vsel %vm109, %v69, 0
    %v168 = vsel %vm109, %v70, 0
    %v171 = vsel %vm109, %v71, 0
    %v174 = vsel %vm109, %v72, 0
    %v177 = vsel %vm109, %v73, 0
    %v180 = vsel %vm109, %v74, 0
    %v183 = vsel %vm109, %v75, 0
    %v186 = vsel %vm109, %v76, 0
    %v189 = vsel %vm109, %v77, 0
    %v192 = vsel %vm109, %v78, 0
    %v195 = vsel %vm109, %v79, 0
    %v198 = vsel %vm109, %v80, 0
    %v201 = vsel %vm109, %v81, 0
    %v204 = vsel %vm109, %v82, 0
    %v207 = vsel %vm109, %v83, 0
    %v210 = vsel %vm109, %v84, 0
    %v213 = vsel %vm109, %v85, 0
    %v216 = vsel %vm109, %v86, 0
    %v219 = vsel %vm109, %v87, 0
    %v222 = vsel %vm109, %v88, 0
    %v225 = vsel %vm109, %v89, 0
    %v228 = vsel %vm109, %v90, 0
    %v231 = vsel %vm109, %v91, 0
    %v234 = vsel %vm109, %v92, 0
    %v237 = vsel %vm109, %v93, 0
    %v240 = vsel %vm109, %v94, 0
    %v243 = vsel %vm109, %v95, 0
    %v246 = vsel %vm109, %v96, 0
    %v249 = vsel %vm109, %v97, 0
    %v252 = vsel %vm109, %v98, 0
    %v255 = vsel %vm109, %v99, 0
    %vm257 = vcmask 1043456
    %v259 = vsel %vm257, %v104, 0
    %261 = vmatpush.msra.mxu0 0.0
    %262 = vmatpush.msra.mxu0 0.0
    %263 = vmatpush.msra.mxu0 0.0
    %264 = vmatpush.msra.mxu0 0.0
    %265 = vmatpush.msra.mxu0 0.0
    %266 = vmatpush.msra.mxu0 0.0
    %267 = vmatpush.msra.mxu0 0.0
    %268 = vmatpush.msra.mxu0 0.0
    %269 = vmatpush.msra.mxu0 0.0
    %270 = vmatpush.msra.mxu0 0.0
    %271 = vmatpush.msra.mxu0 0.0
    %272 = vmatpush.msra.mxu0 %v259
    %273 = vmatpush.msra.mxu0 %v103
    %274 = vmatpush.msra.mxu0 %v102
    %275 = vmatpush.msra.mxu0 %v101
    %276 = vmatpush.msra.mxu0 %v100
    %277 = vmatmul.f32.gmra.mxu0 %v111
    %v278 = vpop.f32.mrf.mxu0
    %v279 = vadd.f32 %v107, %v278
    %280 = vmatmul.f32.gmra.mxu0 %v114
    %v281 = vpop.f32.mrf.mxu0
    %v282 = vadd.f32 %v107, %v281
    %283 = vmatmul.f32.gmra.mxu0 %v117
    %v284 = vpop.f32.mrf.mxu0
    %v285 = vadd.f32 %v107, %v284
    %286 = vmatmul.f32.gmra.mxu0 %v120
    %v287 = vpop.f32.mrf.mxu0
    %v288 = vadd.f32 %v107, %v287
    %289 = vmatmul.f32.gmra.mxu0 %v123
    %v290 = vpop.f32.mrf.mxu0
    %v291 = vadd.f32 %v107, %v290
    %292 = vmatmul.f32.gmra.mxu0 %v126
    %v293 = vpop.f32.mrf.mxu0
    %v294 = vadd.f32 %v107, %v293
    %295 = vmatmul.f32.gmra.mxu0 %v129
    %v296 = vpop.f32.mrf.mxu0
    %v297 = vadd.f32 %v107, %v296
    %298 = vmatmul.f32.gmra.mxu0 %v132
    %v299 = vpop.f32.mrf.mxu0
    %v300 = vadd.f32 %v107, %v299
    %301 = vmatmul.f32.gmra.mxu0 %v135
    %v302 = vpop.f32.mrf.mxu0
    %v303 = vadd.f32 %v107, %v302
    %304 = vmatmul.f32.gmra.mxu0 %v138
    %v305 = vpop.f32.mrf.mxu0
    %v306 = vadd.f32 %v107, %v305
    %307 = vmatmul.f32.gmra.mxu0 %v141
    %v308 = vpop.f32.mrf.mxu0
    %v309 = vadd.f32 %v107, %v308
    %310 = vmatmul.f32.gmra.mxu0 %v144
    %v311 = vpop.f32.mrf.mxu0
    %v312 = vadd.f32 %v107, %v311
    %313 = vmatmul.f32.gmra.mxu0 %v147
    %v314 = vpop.f32.mrf.mxu0
    %v315 = vadd.f32 %v107, %v314
    %316 = vmatmul.f32.gmra.mxu0 %v150
    %v317 = vpop.f32.mrf.mxu0
    %v318 = vadd.f32 %v107, %v317
    %319 = vmatmul.f32.gmra.mxu0 %v153
    %v320 = vpop.f32.mrf.mxu0
    %v321 = vadd.f32 %v107, %v320
    %322 = vmatmul.f32.gmra.mxu0 %v156
    %v323 = vpop.f32.mrf.mxu0
    %v324 = vadd.f32 %v107, %v323
    %325 = vmatmul.f32.gmra.mxu0 %v159
    %v326 = vpop.f32.mrf.mxu0
    %v327 = vadd.f32 %v107, %v326
    %328 = vmatmul.f32.gmra.mxu0 %v162
    %v329 = vpop.f32.mrf.mxu0
    %v330 = vadd.f32 %v107, %v329
    %331 = vmatmul.f32.gmra.mxu0 %v165
    %v332 = vpop.f32.mrf.mxu0
    %v333 = vadd.f32 %v107, %v332
    %334 = vmatmul.f32.gmra.mxu0 %v168
    %v335 = vpop.f32.mrf.mxu0
    %v336 = vadd.f32 %v107, %v335
    %337 = vmatmul.f32.gmra.mxu0 %v171
    %v338 = vpop.f32.mrf.mxu0
    %v339 = vadd.f32 %v107, %v338
    %340 = vmatmul.f32.gmra.mxu0 %v174
    %v341 = vpop.f32.mrf.mxu0
    %v342 = vadd.f32 %v107, %v341
    %343 = vmatmul.f32.gmra.mxu0 %v177
    %v344 = vpop.f32.mrf.mxu0
    %v345 = vadd.f32 %v107, %v344
    %346 = vmatmul.f32.gmra.mxu0 %v180
    %v347 = vpop.f32.mrf.mxu0
    %v348 = vadd.f32 %v107, %v347
    %349 = vmatmul.f32.gmra.mxu0 %v183
    %v350 = vpop.f32.mrf.mxu0
    %v351 = vadd.f32 %v107, %v350
    %352 = vmatmul.f32.gmra.mxu0 %v186
    %v353 = vpop.f32.mrf.mxu0
    %v354 = vadd.f32 %v107, %v353
    %355 = vmatmul.f32.gmra.mxu0 %v189
    %v356 = vpop.f32.mrf.mxu0
    %v357 = vadd.f32 %v107, %v356
    %358 = vmatmul.f32.gmra.mxu0 %v192
    %v359 = vpop.f32.mrf.mxu0
    %v360 = vadd.f32 %v107, %v359
    %361 = vmatmul.f32.gmra.mxu0 %v195
    %v362 = vpop.f32.mrf.mxu0
    %v363 = vadd.f32 %v107, %v362
    %364 = vmatmul.f32.gmra.mxu0 %v198
    %v365 = vpop.f32.mrf.mxu0
    %v366 = vadd.f32 %v107, %v365
    %367 = vmatmul.f32.gmra.mxu0 %v201
    %v368 = vpop.f32.mrf.mxu0
    %v369 = vadd.f32 %v107, %v368
    %370 = vmatmul.f32.gmra.mxu0 %v204
    %v371 = vpop.f32.mrf.mxu0
    %v372 = vadd.f32 %v107, %v371
    %373 = vmatmul.f32.gmra.mxu0 %v207
    %v374 = vpop.f32.mrf.mxu0
    %v375 = vadd.f32 %v107, %v374
    %376 = vmatmul.f32.gmra.mxu0 %v210
    %v377 = vpop.f32.mrf.mxu0
    %v378 = vadd.f32 %v107, %v377
    %379 = vmatmul.f32.gmra.mxu0 %v213
    %v380 = vpop.f32.mrf.mxu0
    %v381 = vadd.f32 %v107, %v380
    %382 = vmatmul.f32.gmra.mxu0 %v216
    %v383 = vpop.f32.mrf.mxu0
    %v384 = vadd.f32 %v107, %v383
    %385 = vmatmul.f32.gmra.mxu0 %v219
    %v386 = vpop.f32.mrf.mxu0
    %v387 = vadd.f32 %v107, %v386
    %388 = vmatmul.f32.gmra.mxu0 %v222
    %v389 = vpop.f32.mrf.mxu0
    %v390 = vadd.f32 %v107, %v389
    %391 = vmatmul.f32.gmra.mxu0 %v225
    %v392 = vpop.f32.mrf.mxu0
    %v393 = vadd.f32 %v107, %v392
    %394 = vmatmul.f32.gmra.mxu0 %v228
    %v395 = vpop.f32.mrf.mxu0
    %v396 = vadd.f32 %v107, %v395
    %397 = vmatmul.f32.gmra.mxu0 %v231
    %v398 = vpop.f32.mrf.mxu0
    %v399 = vadd.f32 %v107, %v398
    %400 = vmatmul.f32.gmra.mxu0 %v234
    %v401 = vpop.f32.mrf.mxu0
    %v402 = vadd.f32 %v107, %v401
    %403 = vmatmul.f32.gmra.mxu0 %v237
    %v404 = vpop.f32.mrf.mxu0
    %v405 = vadd.f32 %v107, %v404
    %406 = vmatmul.f32.gmra.mxu0 %v240
    %v407 = vpop.f32.mrf.mxu0
    %v408 = vadd.f32 %v107, %v407
    %409 = vmatmul.f32.gmra.mxu0 %v243
    %v410 = vpop.f32.mrf.mxu0
    %v411 = vadd.f32 %v107, %v410
    %412 = vmatmul.f32.gmra.mxu0 %v246
    %v413 = vpop.f32.mrf.mxu0
    %v414 = vadd.f32 %v107, %v413
    %415 = vmatmul.f32.gmra.mxu0 %v249
    %v416 = vpop.f32.mrf.mxu0
    %v417 = vadd.f32 %v107, %v416
    %418 = vmatmul.f32.gmra.mxu0 %v252
    %v419 = vpop.f32.mrf.mxu0
    %v420 = vadd.f32 %v107, %v419
    %421 = vmatmul.f32.gmra.mxu0 %v255
    %v422 = vpop.f32.mrf.mxu0
    %v423 = vadd.f32 %v107, %v422
    %424 = vdwg.mxu0
    %v425 = vmax.f32 %v279, 0.0
    %v426 = vmax.f32 %v282, 0.0
    %v427 = vmax.f32 %v285, 0.0
    %v428 = vmax.f32 %v288, 0.0
    %v429 = vmax.f32 %v291, 0.0
    %v430 = vmax.f32 %v294, 0.0
    %v431 = vmax.f32 %v297, 0.0
    %v432 = vmax.f32 %v300, 0.0
    %v433 = vmax.f32 %v303, 0.0
    %v434 = vmax.f32 %v306, 0.0
    %v435 = vmax.f32 %v309, 0.0
    %v436 = vmax.f32 %v312, 0.0
    %v437 = vmax.f32 %v315, 0.0
    %v438 = vmax.f32 %v318, 0.0
    %v439 = vmax.f32 %v321, 0.0
    %v440 = vmax.f32 %v324, 0.0
    %v441 = vmax.f32 %v327, 0.0
    %v442 = vmax.f32 %v330, 0.0
    %v443 = vmax.f32 %v333, 0.0
    %v444 = vmax.f32 %v336, 0.0
    %v445 = vmax.f32 %v339, 0.0
    %v446 = vmax.f32 %v342, 0.0
    %v447 = vmax.f32 %v345, 0.0
    %v448 = vmax.f32 %v348, 0.0
    %v449 = vmax.f32 %v351, 0.0
    %v450 = vmax.f32 %v354, 0.0
    %v451 = vmax.f32 %v357, 0.0
    %v452 = vmax.f32 %v360, 0.0
    %v453 = vmax.f32 %v363, 0.0
    %v454 = vmax.f32 %v366, 0.0
    %v455 = vmax.f32 %v369, 0.0
    %v456 = vmax.f32 %v372, 0.0
    %v457 = vmax.f32 %v375, 0.0
    %v458 = vmax.f32 %v378, 0.0
    %v459 = vmax.f32 %v381, 0.0
    %v460 = vmax.f32 %v384, 0.0
    %v461 = vmax.f32 %v387, 0.0
    %v462 = vmax.f32 %v390, 0.0
    %v463 = vmax.f32 %v393, 0.0
    %v464 = vmax.f32 %v396, 0.0
    %v465 = vmax.f32 %v399, 0.0
    %v466 = vmax.f32 %v402, 0.0
    %v467 = vmax.f32 %v405, 0.0
    %v468 = vmax.f32 %v408, 0.0
    %v469 = vmax.f32 %v411, 0.0
    %v470 = vmax.f32 %v414, 0.0
    %v471 = vmax.f32 %v417, 0.0
    %v472 = vmax.f32 %v420, 0.0
    %v473 = vmax.f32 %v423, 0.0
    %v474 = vld [vmem:[%s1] sm:$0xff]
    %476 = vst [vmem:[#allocation1] ss:$4 sm:$0xff] %v474
    %v477 = vld.sshfl [vmem:[#allocation1] sm:$0xff pattern:$0x73625140]
    %v478 = vld.sshfl [vmem:[#allocation1 + $0x8] sm:$0xff pattern:$0x73625140]
    %v479 = vld.sshfl [vmem:[#allocation1 + $0x10] sm:$0xff pattern:$0x73625140]
    %v480 = vld.sshfl [vmem:[#allocation1 + $0x18] sm:$0xff pattern:$0x73625140]
    %vm484 = vcmask 64512
    %v485 = vsel %vm484, %v480, 0
    %487 = vmatpush.msra.mxu0 %v440
    %488 = vmatpush.msra.mxu0 %v439
    %489 = vmatpush.msra.mxu0 %v438
    %490 = vmatpush.msra.mxu0 %v437
    %491 = vmatpush.msra.mxu0 %v436
    %492 = vmatpush.msra.mxu0 %v435
    %493 = vmatpush.msra.mxu0 %v434
    %494 = vmatpush.msra.mxu0 %v433
    %495 = vmatpush.msra.mxu0 %v432
    %496 = vmatpush.msra.mxu0 %v431
    %497 = vmatpush.msra.mxu0 %v430
    %498 = vmatpush.msra.mxu0 %v429
    %499 = vmatpush.msra.mxu0 %v428
    %500 = vmatpush.msra.mxu0 %v427
    %501 = vmatpush.msra.mxu0 %v426
    %502 = vmatpush.msra.mxu0 %v425
    %503 = vmatmul.f32.gmra.mxu0 %v477
    %v504 = vpop.f32.mrf.mxu0
    %v505 = vadd.f32 0.0, %v504
    %506 = vdwg.mxu0
    %507 = vmatpush.msra.mxu0 %v456
    %508 = vmatpush.msra.mxu0 %v455
    %509 = vmatpush.msra.mxu0 %v454
    %510 = vmatpush.msra.mxu0 %v453
    %511 = vmatpush.msra.mxu0 %v452
    %512 = vmatpush.msra.mxu0 %v451
    %513 = vmatpush.msra.mxu0 %v450
    %514 = vmatpush.msra.mxu0 %v449
    %515 = vmatpush.msra.mxu0 %v448
    %516 = vmatpush.msra.mxu0 %v447
    %517 = vmatpush.msra.mxu0 %v446
    %518 = vmatpush.msra.mxu0 %v445
    %519 = vmatpush.msra.mxu0 %v444
    %520 = vmatpush.msra.mxu0 %v443
    %521 = vmatpush.msra.mxu0 %v442
    %522 = vmatpush.msra.mxu0 %v441
    %523 = vmatmul.f32.gmra.mxu0 %v478
    %v524 = vpop.f32.mrf.mxu0
    %v525 = vadd.f32 %v505, %v524
    %526 = vdwg.mxu0
    %527 = vmatpush.msra.mxu0 %v472
    %528 = vmatpush.msra.mxu0 %v471
    %529 = vmatpush.msra.mxu0 %v470
    %530 = vmatpush.msra.mxu0 %v469
    %531 = vmatpush.msra.mxu0 %v468
    %532 = vmatpush.msra.mxu0 %v467
    %533 = vmatpush.msra.mxu0 %v466
    %534 = vmatpush.msra.mxu0 %v465
    %535 = vmatpush.msra.mxu0 %v464
    %536 = vmatpush.msra.mxu0 %v463
    %537 = vmatpush.msra.mxu0 %v462
    %538 = vmatpush.msra.mxu0 %v461
    %539 = vmatpush.msra.mxu0 %v460
    %540 = vmatpush.msra.mxu0 %v459
    %541 = vmatpush.msra.mxu0 %v458
    %542 = vmatpush.msra.mxu0 %v457
    %543 = vmatmul.f32.gmra.mxu0 %v479
    %v544 = vpop.f32.mrf.mxu0
    %v545 = vadd.f32 %v525, %v544
    %546 = vdwg.mxu0
    %547 = vmatpush.msra.mxu0 0.0
    %548 = vmatpush.msra.mxu0 0.0
    %549 = vmatpush.msra.mxu0 0.0
    %550 = vmatpush.msra.mxu0 0.0
    %551 = vmatpush.msra.mxu0 0.0
    %552 = vmatpush.msra.mxu0 0.0
    %553 = vmatpush.msra.mxu0 0.0
    %554 = vmatpush.msra.mxu0 0.0
    %555 = vmatpush.msra.mxu0 0.0
    %556 = vmatpush.msra.mxu0 0.0
    %557 = vmatpush.msra.mxu0 0.0
    %558 = vmatpush.msra.mxu0 0.0
    %559 = vmatpush.msra.mxu0 0.0
    %560 = vmatpush.msra.mxu0 0.0
    %561 = vmatpush.msra.mxu0 0.0
    %562 = vmatpush.msra.mxu0 %v473
    %563 = vmatmul.f32.gmra.mxu0 %v485
    %v564 = vpop.f32.mrf.mxu0
    %v565 = vadd.f32 %v545, %v564
    %566 = vdwg.mxu0
    %v567 = vld [vmem:[%s4] sm:$0xff]
    %v568 = vld [vmem:[%s5] sm:$0x1]
    %v570 = vperm.slane %v568, 0
    %v573 = vsel %vm484, %v565, 0
    %575 = vmatpush.msra.mxu0 0.0
    %576 = vmatpush.msra.mxu0 0.0
    %577 = vmatpush.msra.mxu0 0.0
    %578 = vmatpush.msra.mxu0 0.0
    %579 = vmatpush.msra.mxu0 0.0
    %580 = vmatpush.msra.mxu0 0.0
    %581 = vmatpush.msra.mxu0 0.0
    %582 = vmatpush.msra.mxu0 0.0
    %583 = vmatpush.msra.mxu0 0.0
    %584 = vmatpush.msra.mxu0 0.0
    %585 = vmatpush.msra.mxu0 0.0
    %586 = vmatpush.msra.mxu0 0.0
    %587 = vmatpush.msra.mxu0 0.0
    %588 = vmatpush.msra.mxu0 0.0
    %589 = vmatpush.msra.mxu0 0.0
    %590 = vmatpush.msra.mxu0 %v567
    %591 = vmatmul.f32.gmra.mxu0 %v573
    %v592 = vpop.f32.mrf.mxu0
    %v593 = vadd.f32 %v570, %v592
    %594 = vdwg.mxu0
    %v595 = vmax.f32 %v593, 0.0
    %v596 = vld [vmem:[%s6] sm:$0xff]
    %v597 = vld [vmem:[%s6 + $0x8] sm:$0xff]
    %vm600 = vcmask 1041408
    %v601 = vrot.slane %v596, 6
    %v602 = vrot.slane %v597, 6
    %v603 = vsel %vm600, %v601, %v602
    %v605 = vsel %vm600, %v595, %v601
    %v606 = vld [vmem:[%s7] sm:$0xff]
    %v607 = vld [vmem:[%s7 + $0x8] sm:$0xff]
    %v608 = vld [vmem:[%s7 + $0x10] sm:$0xff]
    %v609 = vld [vmem:[%s7 + $0x18] sm:$0xff]
    %v610 = vld [vmem:[%s9] sm:$0x1]
    %v612 = vperm.slane %v610, 0
    %vm614 = vcmask 261120
    %v616 = vsel %vm614, %v605, 0
    %v618 = vsel %vm614, %v603, 0
    %v620 = vsel %vm614, %v602, 0
    %622 = vmatpush.msra.mxu0 0.0
    %623 = vmatpush.msra.mxu0 0.0
    %624 = vmatpush.msra.mxu0 0.0
    %625 = vmatpush.msra.mxu0 0.0
    %626 = vmatpush.msra.mxu0 0.0
    %627 = vmatpush.msra.mxu0 0.0
    %628 = vmatpush.msra.mxu0 0.0
    %629 = vmatpush.msra.mxu0 0.0
    %630 = vmatpush.msra.mxu0 0.0
    %631 = vmatpush.msra.mxu0 0.0
    %632 = vmatpush.msra.mxu0 0.0
    %633 = vmatpush.msra.mxu0 0.0
    %634 = vmatpush.msra.mxu0 %v609
    %635 = vmatpush.msra.mxu0 %v608
    %636 = vmatpush.msra.mxu0 %v607
    %637 = vmatpush.msra.mxu0 %v606
    %638 = vmatmul.f32.gmra.mxu0 %v616
    %v639 = vpop.f32.mrf.mxu0
    %v640 = vadd.f32 %v612, %v639
    %641 = vmatmul.f32.gmra.mxu0 %v618
    %v642 = vpop.f32.mrf.mxu0
    %v643 = vadd.f32 %v612, %v642
    %644 = vmatmul.f32.gmra.mxu0 %v620
    %v645 = vpop.f32.mrf.mxu0
    %v646 = vadd.f32 %v612, %v645
    %647 = vdwg.mxu0
    %v648 = vld [vmem:[%s8] sm:$0xff]
    %v649 = vld [vmem:[%s8 + $0x8] sm:$0xff]
    %v650 = vld [vmem:[%s8 + $0x10] sm:$0xff]
    %v651 = vld [vmem:[%s8 + $0x18] sm:$0xff]
    %v653 = vsel %vm614, 0.0, 0
    %655 = vmatpush.msra.mxu0 0.0
    %656 = vmatpush.msra.mxu0 0.0
    %657 = vmatpush.msra.mxu0 0.0
    %658 = vmatpush.msra.mxu0 0.0
    %659 = vmatpush.msra.mxu0 0.0
    %660 = vmatpush.msra.mxu0 0.0
    %661 = vmatpush.msra.mxu0 0.0
    %662 = vmatpush.msra.mxu0 0.0
    %663 = vmatpush.msra.mxu0 0.0
    %664 = vmatpush.msra.mxu0 0.0
    %665 = vmatpush.msra.mxu0 0.0
    %666 = vmatpush.msra.mxu0 0.0
    %667 = vmatpush.msra.mxu0 %v651
    %668 = vmatpush.msra.mxu0 %v650
    %669 = vmatpush.msra.mxu0 %v649
    %670 = vmatpush.msra.mxu0 %v648
    %671 = vmatmul.f32.gmra.mxu0 %v653
    %v672 = vpop.f32.mrf.mxu0
    %v673 = vadd.f32 0.0, %v672
    %674 = vdwg.mxu0
    %v675 = vadd.f32 %v640, %v673
    %v676 = vxor.u32 %v675, 2147483648
    %v677 = vmul.f32 %v676, 1.442695
    %v678 = vpow.pop %v677
    %v679 = vadd.f32 %v678, 1.0
    %v680 = vrcp.pop %v679
    %v681 = vmul.f32 %v679, %v680
    %v682 = vsub.f32 1.0, %v681
    %v683 = vmul.f32 %v680, %v682
    %v684 = vadd.f32 %v680, %v683
    %vm685 = vweird.f32 %v679
    %vm686 = vweird.f32 %v680
    %vm687 = vmor %vm685, %vm686
    %v688 = vsel %vm687, %v680, %v684
    %v689 = vand.u32 2147483647, %v679
    %vm690 = vcmp.eq.f32.partialorder %v689, 8.507059e+37
    %v691 = vand.u32 %v679, 2147483648
    %v692 = vor.u32 1.1754944e-38, %v691
    %v693 = vsel %vm690, %v692, %v688
    %v694 = vmul.f32 1.0, %v693
    %v695 = vtanh.pop %v675
    %v696 = vmul.f32 %v694, 0.0
    %698 = vrot.lane.b32.xlu0 %v695, 64
    %v699 = vpop.permute.xlu0 %698
    %v701 = vmul.f32 %v694, %v699
    %703 = vrot.lane.b32.xlu0 %v701, 32
    %v704 = vpop.permute.xlu0 %703
    %v706 = vadd.f32 %v696, %v704
    %v707 = vtanh.pop %v706
    %709 = vrot.lane.b32.xlu0 %v707, 64
    %v710 = vpop.permute.xlu0 %709
    %v712 = vmul.f32 %v694, %v710
    %714 = vrot.lane.b32.xlu0 %v712, 32
    %v715 = vpop.permute.xlu0 %714
    %v716 = vsel %vm614, %v715, 0
    %718 = vmatpush.msra.mxu0 0.0
    %719 = vmatpush.msra.mxu0 0.0
    %720 = vmatpush.msra.mxu0 0.0
    %721 = vmatpush.msra.mxu0 0.0
    %722 = vmatpush.msra.mxu0 0.0
    %723 = vmatpush.msra.mxu0 0.0
    %724 = vmatpush.msra.mxu0 0.0
    %725 = vmatpush.msra.mxu0 0.0
    %726 = vmatpush.msra.mxu0 0.0
    %727 = vmatpush.msra.mxu0 0.0
    %728 = vmatpush.msra.mxu0 0.0
    %729 = vmatpush.msra.mxu0 0.0
    %730 = vmatpush.msra.mxu0 %v651
    %731 = vmatpush.msra.mxu0 %v650
    %732 = vmatpush.msra.mxu0 %v649
    %733 = vmatpush.msra.mxu0 %v648
    %734 = vmatmul.f32.gmra.mxu0 %v716
    %v735 = vpop.f32.mrf.mxu0
    %v736 = vadd.f32 0.0, %v735
    %737 = vdwg.mxu0
    %v739 = vrot.slane %v736, 6
    %v741 = vadd.f32 %v640, %v739
    %v742 = vxor.u32 %v741, 2147483648
    %v743 = vmul.f32 %v742, 1.442695
    %v744 = vpow.pop %v743
    %v745 = vadd.f32 %v744, 1.0
    %v746 = vrcp.pop %v745
    %v747 = vmul.f32 %v745, %v746
    %v748 = vsub.f32 1.0, %v747
    %v749 = vmul.f32 %v746, %v748
    %v750 = vadd.f32 %v746, %v749
    %vm751 = vweird.f32 %v745
    %vm752 = vweird.f32 %v746
    %vm753 = vmor %vm751, %vm752
    %v754 = vsel %vm753, %v746, %v750
    %v755 = vand.u32 2147483647, %v745
    %vm756 = vcmp.eq.f32.partialorder %v755, 8.507059e+37
    %v757 = vand.u32 %v745, 2147483648
    %v758 = vor.u32 1.1754944e-38, %v757
    %v759 = vsel %vm756, %v758, %v754
    %v760 = vmul.f32 1.0, %v759
    %v761 = vtanh.pop %v741
    %v763 = vrot.slane %v706, 6
    %v765 = vmul.f32 %v760, %v763
    %767 = vrot.lane.b32.xlu0 %v761, 64
    %v768 = vpop.permute.xlu0 %767
    %v770 = vmul.f32 %v760, %v768
    %772 = vrot.lane.b32.xlu0 %v770, 32
    %v773 = vpop.permute.xlu0 %772
    %v775 = vadd.f32 %v765, %v773
    %v776 = vtanh.pop %v775
    %778 = vrot.lane.b32.xlu0 %v776, 64
    %v779 = vpop.permute.xlu0 %778
    %v781 = vmul.f32 %v760, %v779
    %v783 = vrot.slane %v781, 2
    %784 = vrot.lane.b32.xlu0 %v783, 32
    %v785 = vpop.permute.xlu0 %784
    %v786 = vsel %vm614, %v785, 0
    %788 = vmatpush.msra.mxu0 0.0
    %789 = vmatpush.msra.mxu0 0.0
    %790 = vmatpush.msra.mxu0 0.0
    %791 = vmatpush.msra.mxu0 0.0
    %792 = vmatpush.msra.mxu0 0.0
    %793 = vmatpush.msra.mxu0 0.0
    %794 = vmatpush.msra.mxu0 0.0
    %795 = vmatpush.msra.mxu0 0.0
    %796 = vmatpush.msra.mxu0 0.0
    %797 = vmatpush.msra.mxu0 0.0
    %798 = vmatpush.msra.mxu0 0.0
    %799 = vmatpush.msra.mxu0 0.0
    %800 = vmatpush.msra.mxu0 %v651
    %801 = vmatpush.msra.mxu0 %v650
    %802 = vmatpush.msra.mxu0 %v649
    %803 = vmatpush.msra.mxu0 %v648
    %804 = vmatmul.f32.gmra.mxu0 %v786
    %v805 = vpop.f32.mrf.mxu0
    %v806 = vadd.f32 0.0, %v805
    %807 = vdwg.mxu0
    %v809 = vrot.slane %v806, 4
    %v811 = vadd.f32 %v640, %v809
    %v812 = vxor.u32 %v811, 2147483648
    %v813 = vmul.f32 %v812, 1.442695
    %v814 = vpow.pop %v813
    %v815 = vadd.f32 %v814, 1.0
    %v816 = vrcp.pop %v815
    %v817 = vmul.f32 %v815, %v816
    %v818 = vsub.f32 1.0, %v817
    %v819 = vmul.f32 %v816, %v818
    %v820 = vadd.f32 %v816, %v819
    %vm821 = vweird.f32 %v815
    %vm822 = vweird.f32 %v816
    %vm823 = vmor %vm821, %vm822
    %v824 = vsel %vm823, %v816, %v820
    %v825 = vand.u32 2147483647, %v815
    %vm826 = vcmp.eq.f32.partialorder %v825, 8.507059e+37
    %v827 = vand.u32 %v815, 2147483648
    %v828 = vor.u32 1.1754944e-38, %v827
    %v829 = vsel %vm826, %v828, %v824
    %v830 = vmul.f32 1.0, %v829
    %v831 = vtanh.pop %v811
    %v833 = vrot.slane %v775, 6
    %v835 = vmul.f32 %v830, %v833
    %837 = vrot.lane.b32.xlu0 %v831, 64
    %v838 = vpop.permute.xlu0 %837
    %v840 = vmul.f32 %v830, %v838
    %842 = vrot.lane.b32.xlu0 %v840, 32
    %v843 = vpop.permute.xlu0 %842
    %v845 = vadd.f32 %v835, %v843
    %v846 = vtanh.pop %v845
    %848 = vrot.lane.b32.xlu0 %v846, 64
    %v849 = vpop.permute.xlu0 %848
    %v851 = vmul.f32 %v830, %v849
    %v853 = vrot.slane %v851, 4
    %854 = vrot.lane.b32.xlu0 %v853, 32
    %v855 = vpop.permute.xlu0 %854
    %v856 = vsel %vm614, %v855, 0
    %858 = vmatpush.msra.mxu0 0.0
    %859 = vmatpush.msra.mxu0 0.0
    %860 = vmatpush.msra.mxu0 0.0
    %861 = vmatpush.msra.mxu0 0.0
    %862 = vmatpush.msra.mxu0 0.0
    %863 = vmatpush.msra.mxu0 0.0
    %864 = vmatpush.msra.mxu0 0.0
    %865 = vmatpush.msra.mxu0 0.0
    %866 = vmatpush.msra.mxu0 0.0
    %867 = vmatpush.msra.mxu0 0.0
    %868 = vmatpush.msra.mxu0 0.0
    %869 = vmatpush.msra.mxu0 0.0
    %870 = vmatpush.msra.mxu0 %v651
    %871 = vmatpush.msra.mxu0 %v650
    %872 = vmatpush.msra.mxu0 %v649
    %873 = vmatpush.msra.mxu0 %v648
    %874 = vmatmul.f32.gmra.mxu0 %v856
    %v875 = vpop.f32.mrf.mxu0
    %v876 = vadd.f32 0.0, %v875
    %877 = vdwg.mxu0
    %v879 = vrot.slane %v876, 2
    %v881 = vadd.f32 %v640, %v879
    %v882 = vxor.u32 %v881, 2147483648
    %v883 = vmul.f32 %v882, 1.442695
    %v884 = vpow.pop %v883
    %v885 = vadd.f32 %v884, 1.0
    %v886 = vrcp.pop %v885
    %v887 = vmul.f32 %v885, %v886
    %v888 = vsub.f32 1.0, %v887
    %v889 = vmul.f32 %v886, %v888
    %v890 = vadd.f32 %v886, %v889
    %vm891 = vweird.f32 %v885
    %vm892 = vweird.f32 %v886
    %vm893 = vmor %vm891, %vm892
    %v894 = vsel %vm893, %v886, %v890
    %v895 = vand.u32 2147483647, %v885
    %vm896 = vcmp.eq.f32.partialorder %v895, 8.507059e+37
    %v897 = vand.u32 %v885, 2147483648
    %v898 = vor.u32 1.1754944e-38, %v897
    %v899 = vsel %vm896, %v898, %v894
    %v900 = vmul.f32 1.0, %v899
    %v901 = vtanh.pop %v881
    %v903 = vrot.slane %v845, 6
    %v905 = vmul.f32 %v900, %v903
    %907 = vrot.lane.b32.xlu0 %v901, 64
    %v908 = vpop.permute.xlu0 %907
    %v910 = vmul.f32 %v900, %v908
    %912 = vrot.lane.b32.xlu0 %v910, 32
    %v913 = vpop.permute.xlu0 %912
    %v915 = vadd.f32 %v905, %v913
    %v916 = vtanh.pop %v915
    %918 = vrot.lane.b32.xlu0 %v916, 64
    %v919 = vpop.permute.xlu0 %918
    %v921 = vmul.f32 %v900, %v919
    %v923 = vrot.slane %v921, 6
    %924 = vrot.lane.b32.xlu0 %v923, 32
    %v925 = vpop.permute.xlu0 %924
    %v926 = vsel %vm614, %v925, 0
    %928 = vmatpush.msra.mxu0 0.0
    %929 = vmatpush.msra.mxu0 0.0
    %930 = vmatpush.msra.mxu0 0.0
    %931 = vmatpush.msra.mxu0 0.0
    %932 = vmatpush.msra.mxu0 0.0
    %933 = vmatpush.msra.mxu0 0.0
    %934 = vmatpush.msra.mxu0 0.0
    %935 = vmatpush.msra.mxu0 0.0
    %936 = vmatpush.msra.mxu0 0.0
    %937 = vmatpush.msra.mxu0 0.0
    %938 = vmatpush.msra.mxu0 0.0
    %939 = vmatpush.msra.mxu0 0.0
    %940 = vmatpush.msra.mxu0 %v651
    %941 = vmatpush.msra.mxu0 %v650
    %942 = vmatpush.msra.mxu0 %v649
    %943 = vmatpush.msra.mxu0 %v648
    %944 = vmatmul.f32.gmra.mxu0 %v926
    %v945 = vpop.f32.mrf.mxu0
    %v946 = vadd.f32 0.0, %v945
    %947 = vdwg.mxu0
    %v948 = vadd.f32 %v643, %v946
    %v949 = vxor.u32 %v948, 2147483648
    %v950 = vmul.f32 %v949, 1.442695
    %v951 = vpow.pop %v950
    %v952 = vadd.f32 %v951, 1.0
    %v953 = vrcp.pop %v952
    %v954 = vmul.f32 %v952, %v953
    %v955 = vsub.f32 1.0, %v954
    %v956 = vmul.f32 %v953, %v955
    %v957 = vadd.f32 %v953, %v956
    %vm958 = vweird.f32 %v952
    %vm959 = vweird.f32 %v953
    %vm960 = vmor %vm958, %vm959
    %v961 = vsel %vm960, %v953, %v957
    %v962 = vand.u32 2147483647, %v952
    %vm963 = vcmp.eq.f32.partialorder %v962, 8.507059e+37
    %v964 = vand.u32 %v952, 2147483648
    %v965 = vor.u32 1.1754944e-38, %v964
    %v966 = vsel %vm963, %v965, %v961
    %v967 = vmul.f32 1.0, %v966
    %v968 = vtanh.pop %v948
    %v970 = vrot.slane %v915, 6
    %v972 = vmul.f32 %v967, %v970
    %974 = vrot.lane.b32.xlu0 %v968, 64
    %v975 = vpop.permute.xlu0 %974
    %v977 = vmul.f32 %v967, %v975
    %979 = vrot.lane.b32.xlu0 %v977, 32
    %v980 = vpop.permute.xlu0 %979
    %v982 = vadd.f32 %v972, %v980
    %v983 = vtanh.pop %v982
    %985 = vrot.lane.b32.xlu0 %v983, 64
    %v986 = vpop.permute.xlu0 %985
    %v988 = vmul.f32 %v967, %v986
    %990 = vrot.lane.b32.xlu0 %v988, 32
    %v991 = vpop.permute.xlu0 %990
    %v992 = vsel %vm614, %v991, 0
    %994 = vmatpush.msra.mxu0 0.0
    %995 = vmatpush.msra.mxu0 0.0
    %996 = vmatpush.msra.mxu0 0.0
    %997 = vmatpush.msra.mxu0 0.0
    %998 = vmatpush.msra.mxu0 0.0
    %999 = vmatpush.msra.mxu0 0.0
    %1000 = vmatpush.msra.mxu0 0.0
    %1001 = vmatpush.msra.mxu0 0.0
    %1002 = vmatpush.msra.mxu0 0.0
    %1003 = vmatpush.msra.mxu0 0.0
    %1004 = vmatpush.msra.mxu0 0.0
    %1005 = vmatpush.msra.mxu0 0.0
    %1006 = vmatpush.msra.mxu0 %v651
    %1007 = vmatpush.msra.mxu0 %v650
    %1008 = vmatpush.msra.mxu0 %v649
    %1009 = vmatpush.msra.mxu0 %v648
    %1010 = vmatmul.f32.gmra.mxu0 %v992
    %v1011 = vpop.f32.mrf.mxu0
    %v1012 = vadd.f32 0.0, %v1011
    %1013 = vdwg.mxu0
    %v1015 = vrot.slane %v1012, 6
    %v1017 = vadd.f32 %v643, %v1015
    %v1018 = vxor.u32 %v1017, 2147483648
    %v1019 = vmul.f32 %v1018, 1.442695
    %v1020 = vpow.pop %v1019
    %v1021 = vadd.f32 %v1020, 1.0
    %v1022 = vrcp.pop %v1021
    %v1023 = vmul.f32 %v1021, %v1022
    %v1024 = vsub.f32 1.0, %v1023
    %v1025 = vmul.f32 %v1022, %v1024
    %v1026 = vadd.f32 %v1022, %v1025
    %vm1027 = vweird.f32 %v1021
    %vm1028 = vweird.f32 %v1022
    %vm1029 = vmor %vm1027, %vm1028
    %v1030 = vsel %vm1029, %v1022, %v1026
    %v1031 = vand.u32 2147483647, %v1021
    %vm1032 = vcmp.eq.f32.partialorder %v1031, 8.507059e+37
    %v1033 = vand.u32 %v1021, 2147483648
    %v1034 = vor.u32 1.1754944e-38, %v1033
    %v1035 = vsel %vm1032, %v1034, %v1030
    %v1036 = vmul.f32 1.0, %v1035
    %v1037 = vtanh.pop %v1017
    %v1039 = vrot.slane %v982, 6
    %v1041 = vmul.f32 %v1036, %v1039
    %1043 = vrot.lane.b32.xlu0 %v1037, 64
    %v1044 = vpop.permute.xlu0 %1043
    %v1046 = vmul.f32 %v1036, %v1044
    %1048 = vrot.lane.b32.xlu0 %v1046, 32
    %v1049 = vpop.permute.xlu0 %1048
    %v1051 = vadd.f32 %v1041, %v1049
    %v1052 = vtanh.pop %v1051
    %1054 = vrot.lane.b32.xlu0 %v1052, 64
    %v1055 = vpop.permute.xlu0 %1054
    %v1057 = vmul.f32 %v1036, %v1055
    %v1059 = vrot.slane %v1057, 2
    %1060 = vrot.lane.b32.xlu0 %v1059, 32
    %v1061 = vpop.permute.xlu0 %1060
    %v1062 = vsel %vm614, %v1061, 0
    %1064 = vmatpush.msra.mxu0 0.0
    %1065 = vmatpush.msra.mxu0 0.0
    %1066 = vmatpush.msra.mxu0 0.0
    %1067 = vmatpush.msra.mxu0 0.0
    %1068 = vmatpush.msra.mxu0 0.0
    %1069 = vmatpush.msra.mxu0 0.0
    %1070 = vmatpush.msra.mxu0 0.0
    %1071 = vmatpush.msra.mxu0 0.0
    %1072 = vmatpush.msra.mxu0 0.0
    %1073 = vmatpush.msra.mxu0 0.0
    %1074 = vmatpush.msra.mxu0 0.0
    %1075 = vmatpush.msra.mxu0 0.0
    %1076 = vmatpush.msra.mxu0 %v651
    %1077 = vmatpush.msra.mxu0 %v650
    %1078 = vmatpush.msra.mxu0 %v649
    %1079 = vmatpush.msra.mxu0 %v648
    %1080 = vmatmul.f32.gmra.mxu0 %v1062
    %v1081 = vpop.f32.mrf.mxu0
    %v1082 = vadd.f32 0.0, %v1081
    %1083 = vdwg.mxu0
    %v1085 = vrot.slane %v1082, 4
    %v1087 = vadd.f32 %v643, %v1085
    %v1088 = vxor.u32 %v1087, 2147483648
    %v1089 = vmul.f32 %v1088, 1.442695
    %v1090 = vpow.pop %v1089
    %v1091 = vadd.f32 %v1090, 1.0
    %v1092 = vrcp.pop %v1091
    %v1093 = vmul.f32 %v1091, %v1092
    %v1094 = vsub.f32 1.0, %v1093
    %v1095 = vmul.f32 %v1092, %v1094
    %v1096 = vadd.f32 %v1092, %v1095
    %vm1097 = vweird.f32 %v1091
    %vm1098 = vweird.f32 %v1092
    %vm1099 = vmor %vm1097, %vm1098
    %v1100 = vsel %vm1099, %v1092, %v1096
    %v1101 = vand.u32 2147483647, %v1091
    %vm1102 = vcmp.eq.f32.partialorder %v1101, 8.507059e+37
    %v1103 = vand.u32 %v1091, 2147483648
    %v1104 = vor.u32 1.1754944e-38, %v1103
    %v1105 = vsel %vm1102, %v1104, %v1100
    %v1106 = vmul.f32 1.0, %v1105
    %v1107 = vtanh.pop %v1087
    %v1109 = vrot.slane %v1051, 6
    %v1111 = vmul.f32 %v1106, %v1109
    %1113 = vrot.lane.b32.xlu0 %v1107, 64
    %v1114 = vpop.permute.xlu0 %1113
    %v1116 = vmul.f32 %v1106, %v1114
    %1118 = vrot.lane.b32.xlu0 %v1116, 32
    %v1119 = vpop.permute.xlu0 %1118
    %v1121 = vadd.f32 %v1111, %v1119
    %v1122 = vtanh.pop %v1121
    %1124 = vrot.lane.b32.xlu0 %v1122, 64
    %v1125 = vpop.permute.xlu0 %1124
    %v1127 = vmul.f32 %v1106, %v1125
    %v1129 = vrot.slane %v1127, 4
    %1130 = vrot.lane.b32.xlu0 %v1129, 32
    %v1131 = vpop.permute.xlu0 %1130
    %v1132 = vsel %vm614, %v1131, 0
    %1134 = vmatpush.msra.mxu0 0.0
    %1135 = vmatpush.msra.mxu0 0.0
    %1136 = vmatpush.msra.mxu0 0.0
    %1137 = vmatpush.msra.mxu0 0.0
    %1138 = vmatpush.msra.mxu0 0.0
    %1139 = vmatpush.msra.mxu0 0.0
    %1140 = vmatpush.msra.mxu0 0.0
    %1141 = vmatpush.msra.mxu0 0.0
    %1142 = vmatpush.msra.mxu0 0.0
    %1143 = vmatpush.msra.mxu0 0.0
    %1144 = vmatpush.msra.mxu0 0.0
    %1145 = vmatpush.msra.mxu0 0.0
    %1146 = vmatpush.msra.mxu0 %v651
    %1147 = vmatpush.msra.mxu0 %v650
    %1148 = vmatpush.msra.mxu0 %v649
    %1149 = vmatpush.msra.mxu0 %v648
    %1150 = vmatmul.f32.gmra.mxu0 %v1132
    %v1151 = vpop.f32.mrf.mxu0
    %v1152 = vadd.f32 0.0, %v1151
    %1153 = vdwg.mxu0
    %v1155 = vrot.slane %v1152, 2
    %v1157 = vadd.f32 %v643, %v1155
    %v1158 = vxor.u32 %v1157, 2147483648
    %v1159 = vmul.f32 %v1158, 1.442695
    %v1160 = vpow.pop %v1159
    %v1161 = vadd.f32 %v1160, 1.0
    %v1162 = vrcp.pop %v1161
    %v1163 = vmul.f32 %v1161, %v1162
    %v1164 = vsub.f32 1.0, %v1163
    %v1165 = vmul.f32 %v1162, %v1164
    %v1166 = vadd.f32 %v1162, %v1165
    %vm1167 = vweird.f32 %v1161
    %vm1168 = vweird.f32 %v1162
    %vm1169 = vmor %vm1167, %vm1168
    %v1170 = vsel %vm1169, %v1162, %v1166
    %v1171 = vand.u32 2147483647, %v1161
    %vm1172 = vcmp.eq.f32.partialorder %v1171, 8.507059e+37
    %v1173 = vand.u32 %v1161, 2147483648
    %v1174 = vor.u32 1.1754944e-38, %v1173
    %v1175 = vsel %vm1172, %v1174, %v1170
    %v1176 = vmul.f32 1.0, %v1175
    %v1177 = vtanh.pop %v1157
    %v1179 = vrot.slane %v1121, 6
    %v1181 = vmul.f32 %v1176, %v1179
    %1183 = vrot.lane.b32.xlu0 %v1177, 64
    %v1184 = vpop.permute.xlu0 %1183
    %v1186 = vmul.f32 %v1176, %v1184
    %1188 = vrot.lane.b32.xlu0 %v1186, 32
    %v1189 = vpop.permute.xlu0 %1188
    %v1191 = vadd.f32 %v1181, %v1189
    %v1192 = vtanh.pop %v1191
    %1194 = vrot.lane.b32.xlu0 %v1192, 64
    %v1195 = vpop.permute.xlu0 %1194
    %v1197 = vmul.f32 %v1176, %v1195
    %v1199 = vrot.slane %v1197, 6
    %1200 = vrot.lane.b32.xlu0 %v1199, 32
    %v1201 = vpop.permute.xlu0 %1200
    %v1202 = vsel %vm614, %v1201, 0
    %1204 = vmatpush.msra.mxu0 0.0
    %1205 = vmatpush.msra.mxu0 0.0
    %1206 = vmatpush.msra.mxu0 0.0
    %1207 = vmatpush.msra.mxu0 0.0
    %1208 = vmatpush.msra.mxu0 0.0
    %1209 = vmatpush.msra.mxu0 0.0
    %1210 = vmatpush.msra.mxu0 0.0
    %1211 = vmatpush.msra.mxu0 0.0
    %1212 = vmatpush.msra.mxu0 0.0
    %1213 = vmatpush.msra.mxu0 0.0
    %1214 = vmatpush.msra.mxu0 0.0
    %1215 = vmatpush.msra.mxu0 0.0
    %1216 = vmatpush.msra.mxu0 %v651
    %1217 = vmatpush.msra.mxu0 %v650
    %1218 = vmatpush.msra.mxu0 %v649
    %1219 = vmatpush.msra.mxu0 %v648
    %1220 = vmatmul.f32.gmra.mxu0 %v1202
    %v1221 = vpop.f32.mrf.mxu0
    %v1222 = vadd.f32 0.0, %v1221
    %1223 = vdwg.mxu0
    %v1224 = vadd.f32 %v646, %v1222
    %v1225 = vxor.u32 %v1224, 2147483648
    %v1226 = vmul.f32 %v1225, 1.442695
    %v1227 = vpow.pop %v1226
    %v1228 = vadd.f32 %v1227, 1.0
    %v1229 = vrcp.pop %v1228
    %v1230 = vmul.f32 %v1228, %v1229
    %v1231 = vsub.f32 1.0, %v1230
    %v1232 = vmul.f32 %v1229, %v1231
    %v1233 = vadd.f32 %v1229, %v1232
    %vm1234 = vweird.f32 %v1228
    %vm1235 = vweird.f32 %v1229
    %vm1236 = vmor %vm1234, %vm1235
    %v1237 = vsel %vm1236, %v1229, %v1233
    %v1238 = vand.u32 2147483647, %v1228
    %vm1239 = vcmp.eq.f32.partialorder %v1238, 8.507059e+37
    %v1240 = vand.u32 %v1228, 2147483648
    %v1241 = vor.u32 1.1754944e-38, %v1240
    %v1242 = vsel %vm1239, %v1241, %v1237
    %v1243 = vmul.f32 1.0, %v1242
    %v1244 = vtanh.pop %v1224
    %v1246 = vrot.slane %v1191, 6
    %v1248 = vmul.f32 %v1243, %v1246
    %1250 = vrot.lane.b32.xlu0 %v1244, 64
    %v1251 = vpop.permute.xlu0 %1250
    %v1253 = vmul.f32 %v1243, %v1251
    %1255 = vrot.lane.b32.xlu0 %v1253, 32
    %v1256 = vpop.permute.xlu0 %1255
    %v1258 = vadd.f32 %v1248, %v1256
    %v1259 = vtanh.pop %v1258
    %1261 = vrot.lane.b32.xlu0 %v1259, 64
    %v1262 = vpop.permute.xlu0 %1261
    %v1264 = vmul.f32 %v1243, %v1262
    %v1265 = vsel %vm600, %v712, %v781
    %v1266 = vsel %vm257, %v1265, %v851
    %vm1267 = vcmask 1045504
    %v1268 = vsel %vm1267, %v1266, %v921
    %v1269 = vsel %vm600, %v988, %v1057
    %v1270 = vsel %vm257, %v1269, %v1127
    %v1271 = vsel %vm1267, %v1270, %v1197
    %v1272 = vld [vmem:[%s10] sm:$0xff]
    %v1273 = vld [vmem:[%s10 + $0x8] sm:$0xff]
    %v1274 = vld [vmem:[%s10 + $0x10] sm:$0xff]
    %v1275 = vld [vmem:[%s10 + $0x18] sm:$0xff]
    %v1276 = vld [vmem:[%s12] sm:$0x1]
    %v1278 = vperm.slane %v1276, 0
    %1283 = vrot.lane.b32.xlu0 %v1268, 32
    %v1284 = vpop.permute.xlu0 %1283
    %1285 = vrot.lane.b32.xlu0 %v1271, 32
    %v1286 = vpop.permute.xlu0 %1285
    %1287 = vrot.lane.b32.xlu0 %v1264, 32
    %v1288 = vpop.permute.xlu0 %1287
    %v1289 = vsel %vm614, %v1284, 0
    %v1291 = vsel %vm614, %v1286, 0
    %v1293 = vsel %vm614, %v1288, 0
    %1295 = vmatpush.msra.mxu0 0.0
    %1296 = vmatpush.msra.mxu0 0.0
    %1297 = vmatpush.msra.mxu0 0.0
    %1298 = vmatpush.msra.mxu0 0.0
    %1299 = vmatpush.msra.mxu0 0.0
    %1300 = vmatpush.msra.mxu0 0.0
    %1301 = vmatpush.msra.mxu0 0.0
    %1302 = vmatpush.msra.mxu0 0.0
    %1303 = vmatpush.msra.mxu0 0.0
    %1304 = vmatpush.msra.mxu0 0.0
    %1305 = vmatpush.msra.mxu0 0.0
    %1306 = vmatpush.msra.mxu0 0.0
    %1307 = vmatpush.msra.mxu0 %v1275
    %1308 = vmatpush.msra.mxu0 %v1274
    %1309 = vmatpush.msra.mxu0 %v1273
    %1310 = vmatpush.msra.mxu0 %v1272
    %1311 = vmatmul.f32.gmra.mxu0 %v1289
    %v1312 = vpop.f32.mrf.mxu0
    %v1313 = vadd.f32 %v1278, %v1312
    %1314 = vmatmul.f32.gmra.mxu0 %v1291
    %v1315 = vpop.f32.mrf.mxu0
    %v1316 = vadd.f32 %v1278, %v1315
    %1317 = vmatmul.f32.gmra.mxu0 %v1293
    %v1318 = vpop.f32.mrf.mxu0
    %v1319 = vadd.f32 %v1278, %v1318
    %1320 = vdwg.mxu0
    %v1321 = vld [vmem:[%s11] sm:$0xff]
    %v1322 = vld [vmem:[%s11 + $0x8] sm:$0xff]
    %v1323 = vld [vmem:[%s11 + $0x10] sm:$0xff]
    %v1324 = vld [vmem:[%s11 + $0x18] sm:$0xff]
    %1325 = vmatpush.msra.mxu0 0.0
    %1326 = vmatpush.msra.mxu0 0.0
    %1327 = vmatpush.msra.mxu0 0.0
    %1328 = vmatpush.msra.mxu0 0.0
    %1329 = vmatpush.msra.mxu0 0.0
    %1330 = vmatpush.msra.mxu0 0.0
    %1331 = vmatpush.msra.mxu0 0.0
    %1332 = vmatpush.msra.mxu0 0.0
    %1333 = vmatpush.msra.mxu0 0.0
    %1334 = vmatpush.msra.mxu0 0.0
    %1335 = vmatpush.msra.mxu0 0.0
    %1336 = vmatpush.msra.mxu0 0.0
    %1337 = vmatpush.msra.mxu0 %v1324
    %1338 = vmatpush.msra.mxu0 %v1323
    %1339 = vmatpush.msra.mxu0 %v1322
    %1340 = vmatpush.msra.mxu0 %v1321
    %1341 = vmatmul.f32.gmra.mxu0 %v653
    %v1342 = vpop.f32.mrf.mxu0
    %v1343 = vadd.f32 0.0, %v1342
    %1344 = vdwg.mxu0
    %v1345 = vadd.f32 %v1313, %v1343
    %v1346 = vxor.u32 %v1345, 2147483648
    %v1347 = vmul.f32 %v1346, 1.442695
    %v1348 = vpow.pop %v1347
    %v1349 = vadd.f32 %v1348, 1.0
    %v1350 = vrcp.pop %v1349
    %v1351 = vmul.f32 %v1349, %v1350
    %v1352 = vsub.f32 1.0, %v1351
    %v1353 = vmul.f32 %v1350, %v1352
    %v1354 = vadd.f32 %v1350, %v1353
    %vm1355 = vweird.f32 %v1349
    %vm1356 = vweird.f32 %v1350
    %vm1357 = vmor %vm1355, %vm1356
    %v1358 = vsel %vm1357, %v1350, %v1354
    %v1359 = vand.u32 2147483647, %v1349
    %vm1360 = vcmp.eq.f32.partialorder %v1359, 8.507059e+37
    %v1361 = vand.u32 %v1349, 2147483648
    %v1362 = vor.u32 1.1754944e-38, %v1361
    %v1363 = vsel %vm1360, %v1362, %v1358
    %v1364 = vmul.f32 1.0, %v1363
    %v1365 = vtanh.pop %v1345
    %v1366 = vmul.f32 %v1364, 0.0
    %1368 = vrot.lane.b32.xlu0 %v1365, 64
    %v1369 = vpop.permute.xlu0 %1368
    %v1371 = vmul.f32 %v1364, %v1369
    %1373 = vrot.lane.b32.xlu0 %v1371, 32
    %v1374 = vpop.permute.xlu0 %1373
    %v1376 = vadd.f32 %v1366, %v1374
    %v1377 = vtanh.pop %v1376
    %1379 = vrot.lane.b32.xlu0 %v1377, 64
    %v1380 = vpop.permute.xlu0 %1379
    %v1382 = vmul.f32 %v1364, %v1380
    %1384 = vrot.lane.b32.xlu0 %v1382, 32
    %v1385 = vpop.permute.xlu0 %1384
    %v1386 = vsel %vm614, %v1385, 0
    %1388 = vmatpush.msra.mxu0 0.0
    %1389 = vmatpush.msra.mxu0 0.0
    %1390 = vmatpush.msra.mxu0 0.0
    %1391 = vmatpush.msra.mxu0 0.0
    %1392 = vmatpush.msra.mxu0 0.0
    %1393 = vmatpush.msra.mxu0 0.0
    %1394 = vmatpush.msra.mxu0 0.0
    %1395 = vmatpush.msra.mxu0 0.0
    %1396 = vmatpush.msra.mxu0 0.0
    %1397 = vmatpush.msra.mxu0 0.0
    %1398 = vmatpush.msra.mxu0 0.0
    %1399 = vmatpush.msra.mxu0 0.0
    %1400 = vmatpush.msra.mxu0 %v1324
    %1401 = vmatpush.msra.mxu0 %v1323
    %1402 = vmatpush.msra.mxu0 %v1322
    %1403 = vmatpush.msra.mxu0 %v1321
    %1404 = vmatmul.f32.gmra.mxu0 %v1386
    %v1405 = vpop.f32.mrf.mxu0
    %v1406 = vadd.f32 0.0, %v1405
    %1407 = vdwg.mxu0
    %v1409 = vrot.slane %v1406, 6
    %v1411 = vadd.f32 %v1313, %v1409
    %v1412 = vxor.u32 %v1411, 2147483648
    %v1413 = vmul.f32 %v1412, 1.442695
    %v1414 = vpow.pop %v1413
    %v1415 = vadd.f32 %v1414, 1.0
    %v1416 = vrcp.pop %v1415
    %v1417 = vmul.f32 %v1415, %v1416
    %v1418 = vsub.f32 1.0, %v1417
    %v1419 = vmul.f32 %v1416, %v1418
    %v1420 = vadd.f32 %v1416, %v1419
    %vm1421 = vweird.f32 %v1415
    %vm1422 = vweird.f32 %v1416
    %vm1423 = vmor %vm1421, %vm1422
    %v1424 = vsel %vm1423, %v1416, %v1420
    %v1425 = vand.u32 2147483647, %v1415
    %vm1426 = vcmp.eq.f32.partialorder %v1425, 8.507059e+37
    %v1427 = vand.u32 %v1415, 2147483648
    %v1428 = vor.u32 1.1754944e-38, %v1427
    %v1429 = vsel %vm1426, %v1428, %v1424
    %v1430 = vmul.f32 1.0, %v1429
    %v1431 = vtanh.pop %v1411
    %v1433 = vrot.slane %v1376, 6
    %v1435 = vmul.f32 %v1430, %v1433
    %1437 = vrot.lane.b32.xlu0 %v1431, 64
    %v1438 = vpop.permute.xlu0 %1437
    %v1440 = vmul.f32 %v1430, %v1438
    %1442 = vrot.lane.b32.xlu0 %v1440, 32
    %v1443 = vpop.permute.xlu0 %1442
    %v1445 = vadd.f32 %v1435, %v1443
    %v1446 = vtanh.pop %v1445
    %1448 = vrot.lane.b32.xlu0 %v1446, 64
    %v1449 = vpop.permute.xlu0 %1448
    %v1451 = vmul.f32 %v1430, %v1449
    %v1453 = vrot.slane %v1451, 2
    %1454 = vrot.lane.b32.xlu0 %v1453, 32
    %v1455 = vpop.permute.xlu0 %1454
    %v1456 = vsel %vm614, %v1455, 0
    %1458 = vmatpush.msra.mxu0 0.0
    %1459 = vmatpush.msra.mxu0 0.0
    %1460 = vmatpush.msra.mxu0 0.0
    %1461 = vmatpush.msra.mxu0 0.0
    %1462 = vmatpush.msra.mxu0 0.0
    %1463 = vmatpush.msra.mxu0 0.0
    %1464 = vmatpush.msra.mxu0 0.0
    %1465 = vmatpush.msra.mxu0 0.0
    %1466 = vmatpush.msra.mxu0 0.0
    %1467 = vmatpush.msra.mxu0 0.0
    %1468 = vmatpush.msra.mxu0 0.0
    %1469 = vmatpush.msra.mxu0 0.0
    %1470 = vmatpush.msra.mxu0 %v1324
    %1471 = vmatpush.msra.mxu0 %v1323
    %1472 = vmatpush.msra.mxu0 %v1322
    %1473 = vmatpush.msra.mxu0 %v1321
    %1474 = vmatmul.f32.gmra.mxu0 %v1456
    %v1475 = vpop.f32.mrf.mxu0
    %v1476 = vadd.f32 0.0, %v1475
    %1477 = vdwg.mxu0
    %v1479 = vrot.slane %v1476, 4
    %v1481 = vadd.f32 %v1313, %v1479
    %v1482 = vxor.u32 %v1481, 2147483648
    %v1483 = vmul.f32 %v1482, 1.442695
    %v1484 = vpow.pop %v1483
    %v1485 = vadd.f32 %v1484, 1.0
    %v1486 = vrcp.pop %v1485
    %v1487 = vmul.f32 %v1485, %v1486
    %v1488 = vsub.f32 1.0, %v1487
    %v1489 = vmul.f32 %v1486, %v1488
    %v1490 = vadd.f32 %v1486, %v1489
    %vm1491 = vweird.f32 %v1485
    %vm1492 = vweird.f32 %v1486
    %vm1493 = vmor %vm1491, %vm1492
    %v1494 = vsel %vm1493, %v1486, %v1490
    %v1495 = vand.u32 2147483647, %v1485
    %vm1496 = vcmp.eq.f32.partialorder %v1495, 8.507059e+37
    %v1497 = vand.u32 %v1485, 2147483648
    %v1498 = vor.u32 1.1754944e-38, %v1497
    %v1499 = vsel %vm1496, %v1498, %v1494
    %v1500 = vmul.f32 1.0, %v1499
    %v1501 = vtanh.pop %v1481
    %v1503 = vrot.slane %v1445, 6
    %v1505 = vmul.f32 %v1500, %v1503
    %1507 = vrot.lane.b32.xlu0 %v1501, 64
    %v1508 = vpop.permute.xlu0 %1507
    %v1510 = vmul.f32 %v1500, %v1508
    %1512 = vrot.lane.b32.xlu0 %v1510, 32
    %v1513 = vpop.permute.xlu0 %1512
    %v1515 = vadd.f32 %v1505, %v1513
    %v1516 = vtanh.pop %v1515
    %1518 = vrot.lane.b32.xlu0 %v1516, 64
    %v1519 = vpop.permute.xlu0 %1518
    %v1521 = vmul.f32 %v1500, %v1519
    %v1523 = vrot.slane %v1521, 4
    %1524 = vrot.lane.b32.xlu0 %v1523, 32
    %v1525 = vpop.permute.xlu0 %1524
    %v1526 = vsel %vm614, %v1525, 0
    %1528 = vmatpush.msra.mxu0 0.0
    %1529 = vmatpush.msra.mxu0 0.0
    %1530 = vmatpush.msra.mxu0 0.0
    %1531 = vmatpush.msra.mxu0 0.0
    %1532 = vmatpush.msra.mxu0 0.0
    %1533 = vmatpush.msra.mxu0 0.0
    %1534 = vmatpush.msra.mxu0 0.0
    %1535 = vmatpush.msra.mxu0 0.0
    %1536 = vmatpush.msra.mxu0 0.0
    %1537 = vmatpush.msra.mxu0 0.0
    %1538 = vmatpush.msra.mxu0 0.0
    %1539 = vmatpush.msra.mxu0 0.0
    %1540 = vmatpush.msra.mxu0 %v1324
    %1541 = vmatpush.msra.mxu0 %v1323
    %1542 = vmatpush.msra.mxu0 %v1322
    %1543 = vmatpush.msra.mxu0 %v1321
    %1544 = vmatmul.f32.gmra.mxu0 %v1526
    %v1545 = vpop.f32.mrf.mxu0
    %v1546 = vadd.f32 0.0, %v1545
    %1547 = vdwg.mxu0
    %v1549 = vrot.slane %v1546, 2
    %v1551 = vadd.f32 %v1313, %v1549
    %v1552 = vxor.u32 %v1551, 2147483648
    %v1553 = vmul.f32 %v1552, 1.442695
    %v1554 = vpow.pop %v1553
    %v1555 = vadd.f32 %v1554, 1.0
    %v1556 = vrcp.pop %v1555
    %v1557 = vmul.f32 %v1555, %v1556
    %v1558 = vsub.f32 1.0, %v1557
    %v1559 = vmul.f32 %v1556, %v1558
    %v1560 = vadd.f32 %v1556, %v1559
    %vm1561 = vweird.f32 %v1555
    %vm1562 = vweird.f32 %v1556
    %vm1563 = vmor %vm1561, %vm1562
    %v1564 = vsel %vm1563, %v1556, %v1560
    %v1565 = vand.u32 2147483647, %v1555
    %vm1566 = vcmp.eq.f32.partialorder %v1565, 8.507059e+37
    %v1567 = vand.u32 %v1555, 2147483648
    %v1568 = vor.u32 1.1754944e-38, %v1567
    %v1569 = vsel %vm1566, %v1568, %v1564
    %v1570 = vmul.f32 1.0, %v1569
    %v1571 = vtanh.pop %v1551
    %v1573 = vrot.slane %v1515, 6
    %v1575 = vmul.f32 %v1570, %v1573
    %1577 = vrot.lane.b32.xlu0 %v1571, 64
    %v1578 = vpop.permute.xlu0 %1577
    %v1580 = vmul.f32 %v1570, %v1578
    %1582 = vrot.lane.b32.xlu0 %v1580, 32
    %v1583 = vpop.permute.xlu0 %1582
    %v1585 = vadd.f32 %v1575, %v1583
    %v1586 = vtanh.pop %v1585
    %1588 = vrot.lane.b32.xlu0 %v1586, 64
    %v1589 = vpop.permute.xlu0 %1588
    %v1591 = vmul.f32 %v1570, %v1589
    %v1593 = vrot.slane %v1591, 6
    %1594 = vrot.lane.b32.xlu0 %v1593, 32
    %v1595 = vpop.permute.xlu0 %1594
    %v1596 = vsel %vm614, %v1595, 0
    %1598 = vmatpush.msra.mxu0 0.0
    %1599 = vmatpush.msra.mxu0 0.0
    %1600 = vmatpush.msra.mxu0 0.0
    %1601 = vmatpush.msra.mxu0 0.0
    %1602 = vmatpush.msra.mxu0 0.0
    %1603 = vmatpush.msra.mxu0 0.0
    %1604 = vmatpush.msra.mxu0 0.0
    %1605 = vmatpush.msra.mxu0 0.0
    %1606 = vmatpush.msra.mxu0 0.0
    %1607 = vmatpush.msra.mxu0 0.0
    %1608 = vmatpush.msra.mxu0 0.0
    %1609 = vmatpush.msra.mxu0 0.0
    %1610 = vmatpush.msra.mxu0 %v1324
    %1611 = vmatpush.msra.mxu0 %v1323
    %1612 = vmatpush.msra.mxu0 %v1322
    %1613 = vmatpush.msra.mxu0 %v1321
    %1614 = vmatmul.f32.gmra.mxu0 %v1596
    %v1615 = vpop.f32.mrf.mxu0
    %v1616 = vadd.f32 0.0, %v1615
    %1617 = vdwg.mxu0
    %v1618 = vadd.f32 %v1316, %v1616
    %v1619 = vxor.u32 %v1618, 2147483648
    %v1620 = vmul.f32 %v1619, 1.442695
    %v1621 = vpow.pop %v1620
    %v1622 = vadd.f32 %v1621, 1.0
    %v1623 = vrcp.pop %v1622
    %v1624 = vmul.f32 %v1622, %v1623
    %v1625 = vsub.f32 1.0, %v1624
    %v1626 = vmul.f32 %v1623, %v1625
    %v1627 = vadd.f32 %v1623, %v1626
    %vm1628 = vweird.f32 %v1622
    %vm1629 = vweird.f32 %v1623
    %vm1630 = vmor %vm1628, %vm1629
    %v1631 = vsel %vm1630, %v1623, %v1627
    %v1632 = vand.u32 2147483647, %v1622
    %vm1633 = vcmp.eq.f32.partialorder %v1632, 8.507059e+37
    %v1634 = vand.u32 %v1622, 2147483648
    %v1635 = vor.u32 1.1754944e-38, %v1634
    %v1636 = vsel %vm1633, %v1635, %v1631
    %v1637 = vmul.f32 1.0, %v1636
    %v1638 = vtanh.pop %v1618
    %v1640 = vrot.slane %v1585, 6
    %v1642 = vmul.f32 %v1637, %v1640
    %1644 = vrot.lane.b32.xlu0 %v1638, 64
    %v1645 = vpop.permute.xlu0 %1644
    %v1647 = vmul.f32 %v1637, %v1645
    %1649 = vrot.lane.b32.xlu0 %v1647, 32
    %v1650 = vpop.permute.xlu0 %1649
    %v1652 = vadd.f32 %v1642, %v1650
    %v1653 = vtanh.pop %v1652
    %1655 = vrot.lane.b32.xlu0 %v1653, 64
    %v1656 = vpop.permute.xlu0 %1655
    %v1658 = vmul.f32 %v1637, %v1656
    %1660 = vrot.lane.b32.xlu0 %v1658, 32
    %v1661 = vpop.permute.xlu0 %1660
    %v1662 = vsel %vm614, %v1661, 0
    %1664 = vmatpush.msra.mxu0 0.0
    %1665 = vmatpush.msra.mxu0 0.0
    %1666 = vmatpush.msra.mxu0 0.0
    %1667 = vmatpush.msra.mxu0 0.0
    %1668 = vmatpush.msra.mxu0 0.0
    %1669 = vmatpush.msra.mxu0 0.0
    %1670 = vmatpush.msra.mxu0 0.0
    %1671 = vmatpush.msra.mxu0 0.0
    %1672 = vmatpush.msra.mxu0 0.0
    %1673 = vmatpush.msra.mxu0 0.0
    %1674 = vmatpush.msra.mxu0 0.0
    %1675 = vmatpush.msra.mxu0 0.0
    %1676 = vmatpush.msra.mxu0 %v1324
    %1677 = vmatpush.msra.mxu0 %v1323
    %1678 = vmatpush.msra.mxu0 %v1322
    %1679 = vmatpush.msra.mxu0 %v1321
    %1680 = vmatmul.f32.gmra.mxu0 %v1662
    %v1681 = vpop.f32.mrf.mxu0
    %v1682 = vadd.f32 0.0, %v1681
    %1683 = vdwg.mxu0
    %v1685 = vrot.slane %v1682, 6
    %v1687 = vadd.f32 %v1316, %v1685
    %v1688 = vxor.u32 %v1687, 2147483648
    %v1689 = vmul.f32 %v1688, 1.442695
    %v1690 = vpow.pop %v1689
    %v1691 = vadd.f32 %v1690, 1.0
    %v1692 = vrcp.pop %v1691
    %v1693 = vmul.f32 %v1691, %v1692
    %v1694 = vsub.f32 1.0, %v1693
    %v1695 = vmul.f32 %v1692, %v1694
    %v1696 = vadd.f32 %v1692, %v1695
    %vm1697 = vweird.f32 %v1691
    %vm1698 = vweird.f32 %v1692
    %vm1699 = vmor %vm1697, %vm1698
    %v1700 = vsel %vm1699, %v1692, %v1696
    %v1701 = vand.u32 2147483647, %v1691
    %vm1702 = vcmp.eq.f32.partialorder %v1701, 8.507059e+37
    %v1703 = vand.u32 %v1691, 2147483648
    %v1704 = vor.u32 1.1754944e-38, %v1703
    %v1705 = vsel %vm1702, %v1704, %v1700
    %v1706 = vmul.f32 1.0, %v1705
    %v1707 = vtanh.pop %v1687
    %v1709 = vrot.slane %v1652, 6
    %v1711 = vmul.f32 %v1706, %v1709
    %1713 = vrot.lane.b32.xlu0 %v1707, 64
    %v1714 = vpop.permute.xlu0 %1713
    %v1716 = vmul.f32 %v1706, %v1714
    %1718 = vrot.lane.b32.xlu0 %v1716, 32
    %v1719 = vpop.permute.xlu0 %1718
    %v1721 = vadd.f32 %v1711, %v1719
    %v1722 = vtanh.pop %v1721
    %1724 = vrot.lane.b32.xlu0 %v1722, 64
    %v1725 = vpop.permute.xlu0 %1724
    %v1727 = vmul.f32 %v1706, %v1725
    %v1729 = vrot.slane %v1727, 2
    %1730 = vrot.lane.b32.xlu0 %v1729, 32
    %v1731 = vpop.permute.xlu0 %1730
    %v1732 = vsel %vm614, %v1731, 0
    %1734 = vmatpush.msra.mxu0 0.0
    %1735 = vmatpush.msra.mxu0 0.0
    %1736 = vmatpush.msra.mxu0 0.0
    %1737 = vmatpush.msra.mxu0 0.0
    %1738 = vmatpush.msra.mxu0 0.0
    %1739 = vmatpush.msra.mxu0 0.0
    %1740 = vmatpush.msra.mxu0 0.0
    %1741 = vmatpush.msra.mxu0 0.0
    %1742 = vmatpush.msra.mxu0 0.0
    %1743 = vmatpush.msra.mxu0 0.0
    %1744 = vmatpush.msra.mxu0 0.0
    %1745 = vmatpush.msra.mxu0 0.0
    %1746 = vmatpush.msra.mxu0 %v1324
    %1747 = vmatpush.msra.mxu0 %v1323
    %1748 = vmatpush.msra.mxu0 %v1322
    %1749 = vmatpush.msra.mxu0 %v1321
    %1750 = vmatmul.f32.gmra.mxu0 %v1732
    %v1751 = vpop.f32.mrf.mxu0
    %v1752 = vadd.f32 0.0, %v1751
    %1753 = vdwg.mxu0
    %v1755 = vrot.slane %v1752, 4
    %v1757 = vadd.f32 %v1316, %v1755
    %v1758 = vxor.u32 %v1757, 2147483648
    %v1759 = vmul.f32 %v1758, 1.442695
    %v1760 = vpow.pop %v1759
    %v1761 = vadd.f32 %v1760, 1.0
    %v1762 = vrcp.pop %v1761
    %v1763 = vmul.f32 %v1761, %v1762
    %v1764 = vsub.f32 1.0, %v1763
    %v1765 = vmul.f32 %v1762, %v1764
    %v1766 = vadd.f32 %v1762, %v1765
    %vm1767 = vweird.f32 %v1761
    %vm1768 = vweird.f32 %v1762
    %vm1769 = vmor %vm1767, %vm1768
    %v1770 = vsel %vm1769, %v1762, %v1766
    %v1771 = vand.u32 2147483647, %v1761
    %vm1772 = vcmp.eq.f32.partialorder %v1771, 8.507059e+37
    %v1773 = vand.u32 %v1761, 2147483648
    %v1774 = vor.u32 1.1754944e-38, %v1773
    %v1775 = vsel %vm1772, %v1774, %v1770
    %v1776 = vmul.f32 1.0, %v1775
    %v1777 = vtanh.pop %v1757
    %v1779 = vrot.slane %v1721, 6
    %v1781 = vmul.f32 %v1776, %v1779
    %1783 = vrot.lane.b32.xlu0 %v1777, 64
    %v1784 = vpop.permute.xlu0 %1783
    %v1786 = vmul.f32 %v1776, %v1784
    %1788 = vrot.lane.b32.xlu0 %v1786, 32
    %v1789 = vpop.permute.xlu0 %1788
    %v1791 = vadd.f32 %v1781, %v1789
    %v1792 = vtanh.pop %v1791
    %1794 = vrot.lane.b32.xlu0 %v1792, 64
    %v1795 = vpop.permute.xlu0 %1794
    %v1797 = vmul.f32 %v1776, %v1795
    %v1799 = vrot.slane %v1797, 4
    %1800 = vrot.lane.b32.xlu0 %v1799, 32
    %v1801 = vpop.permute.xlu0 %1800
    %v1802 = vsel %vm614, %v1801, 0
    %1804 = vmatpush.msra.mxu0 0.0
    %1805 = vmatpush.msra.mxu0 0.0
    %1806 = vmatpush.msra.mxu0 0.0
    %1807 = vmatpush.msra.mxu0 0.0
    %1808 = vmatpush.msra.mxu0 0.0
    %1809 = vmatpush.msra.mxu0 0.0
    %1810 = vmatpush.msra.mxu0 0.0
    %1811 = vmatpush.msra.mxu0 0.0
    %1812 = vmatpush.msra.mxu0 0.0
    %1813 = vmatpush.msra.mxu0 0.0
    %1814 = vmatpush.msra.mxu0 0.0
    %1815 = vmatpush.msra.mxu0 0.0
    %1816 = vmatpush.msra.mxu0 %v1324
    %1817 = vmatpush.msra.mxu0 %v1323
    %1818 = vmatpush.msra.mxu0 %v1322
    %1819 = vmatpush.msra.mxu0 %v1321
    %1820 = vmatmul.f32.gmra.mxu0 %v1802
    %v1821 = vpop.f32.mrf.mxu0
    %v1822 = vadd.f32 0.0, %v1821
    %1823 = vdwg.mxu0
    %v1825 = vrot.slane %v1822, 2
    %v1827 = vadd.f32 %v1316, %v1825
    %v1828 = vxor.u32 %v1827, 2147483648
    %v1829 = vmul.f32 %v1828, 1.442695
    %v1830 = vpow.pop %v1829
    %v1831 = vadd.f32 %v1830, 1.0
    %v1832 = vrcp.pop %v1831
    %v1833 = vmul.f32 %v1831, %v1832
    %v1834 = vsub.f32 1.0, %v1833
    %v1835 = vmul.f32 %v1832, %v1834
    %v1836 = vadd.f32 %v1832, %v1835
    %vm1837 = vweird.f32 %v1831
    %vm1838 = vweird.f32 %v1832
    %vm1839 = vmor %vm1837, %vm1838
    %v1840 = vsel %vm1839, %v1832, %v1836
    %v1841 = vand.u32 2147483647, %v1831
    %vm1842 = vcmp.eq.f32.partialorder %v1841, 8.507059e+37
    %v1843 = vand.u32 %v1831, 2147483648
    %v1844 = vor.u32 1.1754944e-38, %v1843
    %v1845 = vsel %vm1842, %v1844, %v1840
    %v1846 = vmul.f32 1.0, %v1845
    %v1847 = vtanh.pop %v1827
    %v1849 = vrot.slane %v1791, 6
    %v1851 = vmul.f32 %v1846, %v1849
    %1853 = vrot.lane.b32.xlu0 %v1847, 64
    %v1854 = vpop.permute.xlu0 %1853
    %v1856 = vmul.f32 %v1846, %v1854
    %1858 = vrot.lane.b32.xlu0 %v1856, 32
    %v1859 = vpop.permute.xlu0 %1858
    %v1861 = vadd.f32 %v1851, %v1859
    %v1862 = vtanh.pop %v1861
    %1864 = vrot.lane.b32.xlu0 %v1862, 64
    %v1865 = vpop.permute.xlu0 %1864
    %v1867 = vmul.f32 %v1846, %v1865
    %v1869 = vrot.slane %v1867, 6
    %1870 = vrot.lane.b32.xlu0 %v1869, 32
    %v1871 = vpop.permute.xlu0 %1870
    %v1872 = vsel %vm614, %v1871, 0
    %1874 = vmatpush.msra.mxu0 0.0
    %1875 = vmatpush.msra.mxu0 0.0
    %1876 = vmatpush.msra.mxu0 0.0
    %1877 = vmatpush.msra.mxu0 0.0
    %1878 = vmatpush.msra.mxu0 0.0
    %1879 = vmatpush.msra.mxu0 0.0
    %1880 = vmatpush.msra.mxu0 0.0
    %1881 = vmatpush.msra.mxu0 0.0
    %1882 = vmatpush.msra.mxu0 0.0
    %1883 = vmatpush.msra.mxu0 0.0
    %1884 = vmatpush.msra.mxu0 0.0
    %1885 = vmatpush.msra.mxu0 0.0
    %1886 = vmatpush.msra.mxu0 %v1324
    %1887 = vmatpush.msra.mxu0 %v1323
    %1888 = vmatpush.msra.mxu0 %v1322
    %1889 = vmatpush.msra.mxu0 %v1321
    %1890 = vmatmul.f32.gmra.mxu0 %v1872
    %v1891 = vpop.f32.mrf.mxu0
    %v1892 = vadd.f32 0.0, %v1891
    %1893 = vdwg.mxu0
    %v1894 = vadd.f32 %v1319, %v1892
    %v1895 = vxor.u32 %v1894, 2147483648
    %v1896 = vmul.f32 %v1895, 1.442695
    %v1897 = vpow.pop %v1896
    %v1898 = vadd.f32 %v1897, 1.0
    %v1899 = vrcp.pop %v1898
    %v1900 = vmul.f32 %v1898, %v1899
    %v1901 = vsub.f32 1.0, %v1900
    %v1902 = vmul.f32 %v1899, %v1901
    %v1903 = vadd.f32 %v1899, %v1902
    %vm1904 = vweird.f32 %v1898
    %vm1905 = vweird.f32 %v1899
    %vm1906 = vmor %vm1904, %vm1905
    %v1907 = vsel %vm1906, %v1899, %v1903
    %v1908 = vand.u32 2147483647, %v1898
    %vm1909 = vcmp.eq.f32.partialorder %v1908, 8.507059e+37
    %v1910 = vand.u32 %v1898, 2147483648
    %v1911 = vor.u32 1.1754944e-38, %v1910
    %v1912 = vsel %vm1909, %v1911, %v1907
    %v1913 = vmul.f32 1.0, %v1912
    %v1914 = vtanh.pop %v1894
    %v1916 = vrot.slane %v1861, 6
    %v1918 = vmul.f32 %v1913, %v1916
    %1920 = vrot.lane.b32.xlu0 %v1914, 64
    %v1921 = vpop.permute.xlu0 %1920
    %v1923 = vmul.f32 %v1913, %v1921
    %1925 = vrot.lane.b32.xlu0 %v1923, 32
    %v1926 = vpop.permute.xlu0 %1925
    %v1928 = vadd.f32 %v1918, %v1926
    %v1929 = vtanh.pop %v1928
    %1931 = vrot.lane.b32.xlu0 %v1929, 64
    %v1932 = vpop.permute.xlu0 %1931
    %v1934 = vmul.f32 %v1913, %v1932
    %v1935 = vsel %vm600, %v1382, %v1451
    %v1936 = vsel %vm257, %v1935, %v1521
    %v1937 = vsel %vm1267, %v1936, %v1591
    %v1938 = vsel %vm600, %v1658, %v1727
    %v1939 = vsel %vm257, %v1938, %v1797
    %v1940 = vsel %vm1267, %v1939, %v1867
    %v1941 = vld [vmem:[%s13] sm:$0xff]
    %v1942 = vld [vmem:[%s13 + $0x8] sm:$0xff]
    %v1943 = vld [vmem:[%s13 + $0x10] sm:$0xff]
    %v1944 = vld [vmem:[%s13 + $0x18] sm:$0xff]
    %v1945 = vld [vmem:[%s14] sm:$0x1]
    %v1947 = vperm.slane %v1945, 0
    %1952 = vrot.lane.b32.xlu0 %v1937, 32
    %v1953 = vpop.permute.xlu0 %1952
    %1954 = vrot.lane.b32.xlu0 %v1940, 32
    %v1955 = vpop.permute.xlu0 %1954
    %1956 = vrot.lane.b32.xlu0 %v1934, 32
    %v1957 = vpop.permute.xlu0 %1956
    %v1958 = vsel %vm614, %v1953, 0
    %v1960 = vsel %vm614, %v1955, 0
    %v1962 = vsel %vm614, %v1957, 0
    %1964 = vmatpush.msra.mxu0 0.0
    %1965 = vmatpush.msra.mxu0 0.0
    %1966 = vmatpush.msra.mxu0 0.0
    %1967 = vmatpush.msra.mxu0 0.0
    %1968 = vmatpush.msra.mxu0 0.0
    %1969 = vmatpush.msra.mxu0 0.0
    %1970 = vmatpush.msra.mxu0 0.0
    %1971 = vmatpush.msra.mxu0 0.0
    %1972 = vmatpush.msra.mxu0 0.0
    %1973 = vmatpush.msra.mxu0 0.0
    %1974 = vmatpush.msra.mxu0 0.0
    %1975 = vmatpush.msra.mxu0 0.0
    %1976 = vmatpush.msra.mxu0 %v1944
    %1977 = vmatpush.msra.mxu0 %v1943
    %1978 = vmatpush.msra.mxu0 %v1942
    %1979 = vmatpush.msra.mxu0 %v1941
    %1980 = vmatmul.f32.gmra.mxu0 %v1958
    %v1981 = vpop.f32.mrf.mxu0
    %v1982 = vadd.f32 %v1947, %v1981
    %1983 = vmatmul.f32.gmra.mxu0 %v1960
    %v1984 = vpop.f32.mrf.mxu0
    %v1985 = vadd.f32 %v1947, %v1984
    %1986 = vmatmul.f32.gmra.mxu0 %v1962
    %v1987 = vpop.f32.mrf.mxu0
    %v1988 = vadd.f32 %v1947, %v1987
    %1989 = vdwg.mxu0
    %1990 = vst [vmem:[#allocation2] sm:$0xff] %v1982
    %1991 = vst [vmem:[#allocation2 + $0x8] sm:$0xff] %v1985
    %1992 = vst [vmem:[#allocation2 + $0x10] sm:$0x3] %v1988
    // Predicated region
    $region62: #{tpu_custom_call.1} parent=1 // pred_check
      _
    $region63: #{tpu_custom_call.1} parent=1 // pred_check_branch
      %1994 = sbr.rel (0) target = $region65
    $region64: #{tpu_custom_call.1} parent=1 // pred_region
      %1996 = vsyncadd [#allocation3], 0
      %s1997 = sshll.u32 [#allocation2], 4
      %s1998 = int_to_ptr.vmem [resolvable:$true] %s1997
      %s1999 = sshll.u32 %s15, 4
      %s2000 = int_to_ptr.hbm [resolvable:$true] %s1999
      %2005 = dma.vmem_to_hbm [thread:$0]  %s1998, 384, %s2000, [#allocation3], 128, 128, 8
    $region65: #{tpu_custom_call.1} parent=1 // pred_fallthru
      _
    // Predicated region
    $region66: #{tpu_custom_call.1} parent=1 // pred_check
      _
    $region67: #{tpu_custom_call.1} parent=1 // pred_check_branch
      %2007 = sbr.rel (0) target = $region69
    $region68: #{tpu_custom_call.1} parent=1 // pred_region
      %2009 = dma.done [#allocation3], 384
    $region69: #{tpu_custom_call.1} parent=1 // pred_fallthru
      _
    %2010 = vsyncpa [#allocation3], 1

</llo_original>
